<compile_context>
chip_gen: v6e
topology: v6e:2x2x1
jax: 0.10.0
libtpu: 0.0.40
codegen_flags: <defaults>
</compile_context>

<pallas_src>
import functools

import jax
import jax.numpy as jnp
from jax import lax
from jax.experimental import pallas as pl
from jax.experimental.pallas import tpu as pltpu


def _pick_vmem_limit_bytes():
    """Per-generation scoped-VMEM budget (defaults are far below physical)."""
    mib = 1024 * 1024
    try:
        info = pltpu.get_tpu_info()
        cap = int(getattr(info, "vmem_capacity_bytes", 64 * mib))
    except Exception:  # non-TPU backend / interpret mode fallback
        cap = 64 * mib
    # ~100 MiB ceiling on v5e/v6e (128 MiB physical), ~56 MiB on v7x (64 MiB).
    return int(max(32 * mib, min(cap - 8 * mib, 100 * mib)))


_VMEM_LIMIT_BYTES = _pick_vmem_limit_bytes()


def _resblock_kernel(x_ref, w1_ref, b1_ref, w2_ref, b2_ref, m_ref, o_ref,
                     patches_ref, *, width):
    """relu(conv2(relu(conv1(x))) + relu(conv1(x))) for one batch element.

    x_ref      : (1, Cp, HW)  f32   activations (NCHW, spatial flattened)
    w*_ref     : (Cp, 9*Cp)   bf16  conv weights, column = (dh*3+dw)*Cp + ci
    b*_ref     : (Cp, 1)      f32   conv bias
    m_ref      : (8, HW)      f32   validity masks, one row per non-center tap
    o_ref      : (1, Cp, HW)  f32   output slab (wrapper slices back to C)
    patches_ref: (9*Cp, HW)   bf16  im2col scratch, reused by both convs
    """
    cp = x_ref.shape[1]
    hw = x_ref.shape[2]
    x = x_ref[0]                                          # (Cp, HW) f32

    # (lane offset, mask row) per tap; center tap (t == 4) needs no mask.
    taps = []
    for dh in range(3):
        for dw in range(3):
            t = dh * 3 + dw
            if t == 4:
                taps.append((0, None))
            else:
                taps.append(((dh - 1) * width + (dw - 1),
                             t if t < 4 else t - 1))

    def conv3x3(inp, w_ref_, b_ref_):
        # Build im2col patches in the bf16 VMEM scratch (one aligned slice
        # store per tap -> no concat copy), then ONE MXU matmul with
        # K = 9*Cp, bf16 operands and f32 accumulation.
        for t, (off, mrow) in enumerate(taps):
            if mrow is None:                              # center tap
                piece = inp
            else:
                # y[:, p] = inp[:, (p + off) % HW]; wrapped/out-of-image lanes
                # are zeroed by the tap mask.  XLU lane rotate (slot is idle).
                rolled = pltpu.roll(inp, shift=(-off) % hw, axis=1)
                piece = rolled * m_ref[pl.ds(mrow, 1), :]
            patches_ref[pl.ds(t * cp, cp), :] = piece.astype(jnp.bfloat16)
        y = jnp.dot(w_ref_[...], patches_ref[...],
                    preferred_element_type=jnp.float32)
        return y + b_ref_[...]

    y1 = conv3x3(x, w1_ref, b1_ref)          # conv2d1 (+bias); bn = Identity
    a1 = jnp.maximum(y1, 0.0)                # inplace ReLU -> residual tap
    y2 = conv3x3(a1, w2_ref, b2_ref)         # conv2d2 (+bias)
    o_ref[0] = jnp.maximum(y2 + a1, 0.0).astype(o_ref.dtype)


@jax.jit
def resblock_forward(x, w1, b1, w2, b2):
    """ResBlockPlain.forward (use_bn=False).  x: (N, C, H, W) float32."""
    n, c, h, w = x.shape
    hw = h * w
    # Round channels up to 16: keeps bf16 (16,128)-tiled patch-slot stores
    # aligned and makes K = 9*Cp >= 144 (fills a 128-deep MXU pass).
    cp = max(16, ((c + 15) // 16) * 16)

    # Activations stay in NCHW; only a free reshape (+ zero channel padding).
    xf = x.reshape(n, c, hw)
    if cp != c:
        xf = jnp.pad(xf, ((0, 0), (0, cp - c), (0, 0)))

    def prep_w(wt):
        # (Cout, Cin, 3, 3) -> (Cp, 9*Cp) bf16; column = (dh*3+dw)*Cp + ci.
        w4 = jnp.transpose(wt, (0, 2, 3, 1))              # (Co, 3, 3, Ci)
        w4 = jnp.pad(w4, ((0, cp - c), (0, 0), (0, 0), (0, cp - c)))
        return w4.reshape(cp, 9 * cp).astype(jnp.bfloat16)

    def prep_b(bv):
        return jnp.pad(bv, (0, cp - c)).reshape(cp, 1).astype(jnp.float32)

    # Per-tap validity masks for padding=1 (zero taps outside the image).
    # One row per non-center tap -> a single aligned (8, HW) tile.
    rr = jnp.arange(h).reshape(h, 1)
    cc = jnp.arange(w).reshape(1, w)
    rows = []
    for dh in range(3):
        for dw in range(3):
            if dh == 1 and dw == 1:
                continue
            valid = ((rr + dh - 1 >= 0) & (rr + dh - 1 <= h - 1) &
                     (cc + dw - 1 >= 0) & (cc + dw - 1 <= w - 1))
            rows.append(valid.reshape(hw))
    tap_masks = jnp.stack(rows, axis=0).astype(jnp.float32)     # (8, HW)

    kernel = functools.partial(_resblock_kernel, width=w)

    out_flat = pl.pallas_call(
        kernel,
        out_shape=jax.ShapeDtypeStruct((n, cp, hw), x.dtype),
        grid_spec=pltpu.PrefetchScalarGridSpec(
            num_scalar_prefetch=0,
            grid=(n,),
            in_specs=[
                pl.BlockSpec((1, cp, hw), lambda b: (b, 0, 0)),
                pl.BlockSpec((cp, 9 * cp), lambda b: (0, 0)),
                pl.BlockSpec((cp, 1), lambda b: (0, 0)),
                pl.BlockSpec((cp, 9 * cp), lambda b: (0, 0)),
                pl.BlockSpec((cp, 1), lambda b: (0, 0)),
                pl.BlockSpec((8, hw), lambda b: (0, 0)),
            ],
            out_specs=pl.BlockSpec((1, cp, hw), lambda b: (b, 0, 0)),
            scratch_shapes=[pltpu.VMEM((9 * cp, hw), jnp.bfloat16)],
        ),
        compiler_params=pltpu.CompilerParams(
            dimension_semantics=("parallel",),
            vmem_limit_bytes=_VMEM_LIMIT_BYTES,
        ),
    )(xf, prep_w(w1), prep_b(b1), prep_w(w2), prep_b(b2), tap_masks)

    # Aligned Cp slab was written in-kernel (unmasked stores); slice here.
    return out_flat[:, :c, :].reshape(n, c, h, w)


def _reference(x, w1, b1, w2, b2):
    """Pure-JAX f32 reference of the PyTorch module (use_bn=False; the inplace
    ReLU makes the residual tap the post-ReLU conv1 activation)."""
    def conv(v, wt, bv):
        y = lax.conv_general_dilated(
            v, wt, window_strides=(1, 1), padding=((1, 1), (1, 1)),
            dimension_numbers=("NCHW", "OIHW", "NCHW"))
        return y + bv.reshape(1, -1, 1, 1)
    a1 = jnp.maximum(conv(x, w1, b1), 0.0)
    y2 = conv(a1, w2, b2)
    return jnp.maximum(y2 + a1, 0.0)


if __name__ == "__main__":
    key = jax.random.PRNGKey(0)
    kx, kw1, kb1, kw2, kb2 = jax.random.split(key, 5)

    N, C, H, W = 2, 4, 16, 16
    x = jax.random.normal(kx, (N, C, H, W), dtype=jnp.float32)

    # Deterministic PyTorch-like uniform init.
    fan_in = C * 3 * 3
    bound = 1.0 / (fan_in ** 0.5)
    w1 = jax.random.uniform(kw1, (C, C, 3, 3), minval=-bound, maxval=bound,
                            dtype=jnp.float32)
    b1 = jax.random.uniform(kb1, (C,), minval=-bound, maxval=bound,
                            dtype=jnp.float32)
    w2 = jax.random.uniform(kw2, (C, C, 3, 3), minval=-bound, maxval=bound,
                            dtype=jnp.float32)
    b2 = jax.random.uniform(kb2, (C,), minval=-bound, maxval=bound,
                            dtype=jnp.float32)

    out = jax.block_until_ready(resblock_forward(x, w1, b1, w2, b2))
    ref = _reference(x, w1, b1, w2, b2)

    assert out.shape == (N, C, H, W)
    # bf16 MXU operands (f32 accumulation) -> relaxed tolerance vs f32 ref.
    assert jnp.allclose(out, ref, atol=5e-2, rtol=5e-2), \
        float(jnp.max(jnp.abs(out - ref)))
    print("KERNEL_OK")
</pallas_src>

<mosaic_0001>
module attributes {stable_mosaic.version = 11 : i64} {
  func.func @_resblock_kernel(%arg0: i32, %arg1: memref<1x16x256xf32, #tpu.memory_space<vmem>>, %arg2: memref<16x144xbf16, #tpu.memory_space<vmem>>, %arg3: memref<16x1xf32, #tpu.memory_space<vmem>>, %arg4: memref<16x144xbf16, #tpu.memory_space<vmem>>, %arg5: memref<16x1xf32, #tpu.memory_space<vmem>>, %arg6: memref<8x256xf32, #tpu.memory_space<vmem>>, %arg7: memref<1x16x256xf32, #tpu.memory_space<vmem>>, %arg8: memref<144x256xbf16, #tpu.memory_space<vmem>>) attributes {dimension_semantics = [#tpu.dimension_semantics<parallel>], iteration_bounds = array<i64: 2>, scalar_prefetch = 0 : i64, scratch_operands = 1 : i64, tpu.core_type = #tpu.core_type<tc>, window_params = [{transform_indices = @transform_0, window_bounds = array<i64: 1, 16, 256>}, {pipeline_mode = #tpu.pipeline_mode<synchronous>, transform_indices = @transform_1, window_bounds = array<i64: 16, 144>}, {pipeline_mode = #tpu.pipeline_mode<synchronous>, transform_indices = @transform_2, window_bounds = array<i64: 16, 1>}, {pipeline_mode = #tpu.pipeline_mode<synchronous>, transform_indices = @transform_3, window_bounds = array<i64: 16, 144>}, {pipeline_mode = #tpu.pipeline_mode<synchronous>, transform_indices = @transform_4, window_bounds = array<i64: 16, 1>}, {pipeline_mode = #tpu.pipeline_mode<synchronous>, transform_indices = @transform_5, window_bounds = array<i64: 8, 256>}, {transform_indices = @transform_6, window_bounds = array<i64: 1, 16, 256>}]} {
    %c0 = arith.constant 0 : index
    %c0_0 = arith.constant 0 : index
    %c0_1 = arith.constant 0 : index
    %0 = vector.load %arg1[%c0, %c0_0, %c0_1] : memref<1x16x256xf32, #tpu.memory_space<vmem>>, vector<1x16x256xf32>
    %1 = vector.shape_cast %0 : vector<1x16x256xf32> to vector<16x256xf32>
    %c17_i32 = arith.constant 17 : i32
    %2 = tpu.dynamic_rotate %1 by %c17_i32 dim 1 : vector<16x256xf32>, i32 -> vector<16x256xf32>
    %c0_2 = arith.constant 0 : index
    %c0_3 = arith.constant 0 : index
    %3 = vector.load %arg6[%c0_2, %c0_3] : memref<8x256xf32, #tpu.memory_space<vmem>>, vector<1x256xf32>
    %4 = vector.broadcast %3 : vector<1x256xf32> to vector<16x256xf32>
    %5 = arith.mulf %2, %4 : vector<16x256xf32>
    %6 = arith.truncf %5 : vector<16x256xf32> to vector<16x256xbf16>
    %c0_4 = arith.constant 0 : index
    %c0_5 = arith.constant 0 : index
    %7 = vector.load %arg8[%c0_4, %c0_5] : memref<144x256xbf16, #tpu.memory_space<vmem>>, vector<16x256xbf16>
    tpu.vector_store %arg8[%c0_4, %c0_5], %6 {strides = array<i32>} : memref<144x256xbf16, #tpu.memory_space<vmem>>, vector<16x256xbf16>,
    %c16_i32 = arith.constant 16 : i32
    %8 = tpu.dynamic_rotate %1 by %c16_i32 dim 1 : vector<16x256xf32>, i32 -> vector<16x256xf32>
    %c1 = arith.constant 1 : index
    %c0_6 = arith.constant 0 : index
    %9 = vector.load %arg6[%c1, %c0_6] : memref<8x256xf32, #tpu.memory_space<vmem>>, vector<1x256xf32>
    %10 = vector.broadcast %9 : vector<1x256xf32> to vector<16x256xf32>
    %11 = arith.mulf %8, %10 : vector<16x256xf32>
    %12 = arith.truncf %11 : vector<16x256xf32> to vector<16x256xbf16>
    %c16 = arith.constant 16 : index
    %c0_7 = arith.constant 0 : index
    %13 = vector.load %arg8[%c16, %c0_7] : memref<144x256xbf16, #tpu.memory_space<vmem>>, vector<16x256xbf16>
    tpu.vector_store %arg8[%c16, %c0_7], %12 {strides = array<i32>} : memref<144x256xbf16, #tpu.memory_space<vmem>>, vector<16x256xbf16>,
    %c15_i32 = arith.constant 15 : i32
    %14 = tpu.dynamic_rotate %1 by %c15_i32 dim 1 : vector<16x256xf32>, i32 -> vector<16x256xf32>
    %c2 = arith.constant 2 : index
    %c0_8 = arith.constant 0 : index
    %15 = vector.load %arg6[%c2, %c0_8] : memref<8x256xf32, #tpu.memory_space<vmem>>, vector<1x256xf32>
    %16 = vector.broadcast %15 : vector<1x256xf32> to vector<16x256xf32>
    %17 = arith.mulf %14, %16 : vector<16x256xf32>
    %18 = arith.truncf %17 : vector<16x256xf32> to vector<16x256xbf16>
    %c32 = arith.constant 32 : index
    %c0_9 = arith.constant 0 : index
    %19 = vector.load %arg8[%c32, %c0_9] : memref<144x256xbf16, #tpu.memory_space<vmem>>, vector<16x256xbf16>
    tpu.vector_store %arg8[%c32, %c0_9], %18 {strides = array<i32>} : memref<144x256xbf16, #tpu.memory_space<vmem>>, vector<16x256xbf16>,
    %c1_i32 = arith.constant 1 : i32
    %20 = tpu.dynamic_rotate %1 by %c1_i32 dim 1 : vector<16x256xf32>, i32 -> vector<16x256xf32>
    %c3 = arith.constant 3 : index
    %c0_10 = arith.constant 0 : index
    %21 = vector.load %arg6[%c3, %c0_10] : memref<8x256xf32, #tpu.memory_space<vmem>>, vector<1x256xf32>
    %22 = vector.broadcast %21 : vector<1x256xf32> to vector<16x256xf32>
    %23 = arith.mulf %20, %22 : vector<16x256xf32>
    %24 = arith.truncf %23 : vector<16x256xf32> to vector<16x256xbf16>
    %c48 = arith.constant 48 : index
    %c0_11 = arith.constant 0 : index
    %25 = vector.load %arg8[%c48, %c0_11] : memref<144x256xbf16, #tpu.memory_space<vmem>>, vector<16x256xbf16>
    tpu.vector_store %arg8[%c48, %c0_11], %24 {strides = array<i32>} : memref<144x256xbf16, #tpu.memory_space<vmem>>, vector<16x256xbf16>,
    %26 = arith.truncf %1 : vector<16x256xf32> to vector<16x256xbf16>
    %c64 = arith.constant 64 : index
    %c0_12 = arith.constant 0 : index
    %27 = vector.load %arg8[%c64, %c0_12] : memref<144x256xbf16, #tpu.memory_space<vmem>>, vector<16x256xbf16>
    tpu.vector_store %arg8[%c64, %c0_12], %26 {strides = array<i32>} : memref<144x256xbf16, #tpu.memory_space<vmem>>, vector<16x256xbf16>,
    %c255_i32 = arith.constant 255 : i32
    %28 = tpu.dynamic_rotate %1 by %c255_i32 dim 1 : vector<16x256xf32>, i32 -> vector<16x256xf32>
    %c4 = arith.constant 4 : index
    %c0_13 = arith.constant 0 : index
    %29 = vector.load %arg6[%c4, %c0_13] : memref<8x256xf32, #tpu.memory_space<vmem>>, vector<1x256xf32>
    %30 = vector.broadcast %29 : vector<1x256xf32> to vector<16x256xf32>
    %31 = arith.mulf %28, %30 : vector<16x256xf32>
    %32 = arith.truncf %31 : vector<16x256xf32> to vector<16x256xbf16>
    %c80 = arith.constant 80 : index
    %c0_14 = arith.constant 0 : index
    %33 = vector.load %arg8[%c80, %c0_14] : memref<144x256xbf16, #tpu.memory_space<vmem>>, vector<16x256xbf16>
    tpu.vector_store %arg8[%c80, %c0_14], %32 {strides = array<i32>} : memref<144x256xbf16, #tpu.memory_space<vmem>>, vector<16x256xbf16>,
    %c241_i32 = arith.constant 241 : i32
    %34 = tpu.dynamic_rotate %1 by %c241_i32 dim 1 : vector<16x256xf32>, i32 -> vector<16x256xf32>
    %c5 = arith.constant 5 : index
    %c0_15 = arith.constant 0 : index
    %35 = vector.load %arg6[%c5, %c0_15] : memref<8x256xf32, #tpu.memory_space<vmem>>, vector<1x256xf32>
    %36 = vector.broadcast %35 : vector<1x256xf32> to vector<16x256xf32>
    %37 = arith.mulf %34, %36 : vector<16x256xf32>
    %38 = arith.truncf %37 : vector<16x256xf32> to vector<16x256xbf16>
    %c96 = arith.constant 96 : index
    %c0_16 = arith.constant 0 : index
    %39 = vector.load %arg8[%c96, %c0_16] : memref<144x256xbf16, #tpu.memory_space<vmem>>, vector<16x256xbf16>
    tpu.vector_store %arg8[%c96, %c0_16], %38 {strides = array<i32>} : memref<144x256xbf16, #tpu.memory_space<vmem>>, vector<16x256xbf16>,
    %c240_i32 = arith.constant 240 : i32
    %40 = tpu.dynamic_rotate %1 by %c240_i32 dim 1 : vector<16x256xf32>, i32 -> vector<16x256xf32>
    %c6 = arith.constant 6 : index
    %c0_17 = arith.constant 0 : index
    %41 = vector.load %arg6[%c6, %c0_17] : memref<8x256xf32, #tpu.memory_space<vmem>>, vector<1x256xf32>
    %42 = vector.broadcast %41 : vector<1x256xf32> to vector<16x256xf32>
    %43 = arith.mulf %40, %42 : vector<16x256xf32>
    %44 = arith.truncf %43 : vector<16x256xf32> to vector<16x256xbf16>
    %c112 = arith.constant 112 : index
    %c0_18 = arith.constant 0 : index
    %45 = vector.load %arg8[%c112, %c0_18] : memref<144x256xbf16, #tpu.memory_space<vmem>>, vector<16x256xbf16>
    tpu.vector_store %arg8[%c112, %c0_18], %44 {strides = array<i32>} : memref<144x256xbf16, #tpu.memory_space<vmem>>, vector<16x256xbf16>,
    %c239_i32 = arith.constant 239 : i32
    %46 = tpu.dynamic_rotate %1 by %c239_i32 dim 1 : vector<16x256xf32>, i32 -> vector<16x256xf32>
    %c7 = arith.constant 7 : index
    %c0_19 = arith.constant 0 : index
    %47 = vector.load %arg6[%c7, %c0_19] : memref<8x256xf32, #tpu.memory_space<vmem>>, vector<1x256xf32>
    %48 = vector.broadcast %47 : vector<1x256xf32> to vector<16x256xf32>
    %49 = arith.mulf %46, %48 : vector<16x256xf32>
    %50 = arith.truncf %49 : vector<16x256xf32> to vector<16x256xbf16>
    %c128 = arith.constant 128 : index
    %c0_20 = arith.constant 0 : index
    %51 = vector.load %arg8[%c128, %c0_20] : memref<144x256xbf16, #tpu.memory_space<vmem>>, vector<16x256xbf16>
    tpu.vector_store %arg8[%c128, %c0_20], %50 {strides = array<i32>} : memref<144x256xbf16, #tpu.memory_space<vmem>>, vector<16x256xbf16>,
    %c0_21 = arith.constant 0 : index
    %c0_22 = arith.constant 0 : index
    %52 = vector.load %arg2[%c0_21, %c0_22] : memref<16x144xbf16, #tpu.memory_space<vmem>>, vector<16x144xbf16>
    %c0_23 = arith.constant 0 : index
    %c0_24 = arith.constant 0 : index
    %53 = vector.load %arg8[%c0_23, %c0_24] : memref<144x256xbf16, #tpu.memory_space<vmem>>, vector<144x256xbf16>
    %cst = arith.constant dense<0.000000e+00> : vector<16x256xf32>
    %54 = tpu.matmul %52, %53, %cst {dimension_numbers = #tpu.dot_dimension_numbers<[1], [0], [0], [1], [0, 0, 1, 1], [], []>} : vector<16x144xbf16>, vector<144x256xbf16>, vector<16x256xf32> -> vector<16x256xf32>
    %c0_25 = arith.constant 0 : index
    %c0_26 = arith.constant 0 : index
    %55 = vector.load %arg3[%c0_25, %c0_26] : memref<16x1xf32, #tpu.memory_space<vmem>>, vector<16x1xf32>
    %56 = vector.broadcast %55 : vector<16x1xf32> to vector<16x256xf32>
    %57 = arith.addf %54, %56 : vector<16x256xf32>
    %cst_27 = arith.constant 0.000000e+00 : f32
    %58 = vector.broadcast %cst_27 : f32 to vector<16x256xf32>
    %59 = arith.maximumf %57, %58 : vector<16x256xf32>
    %c17_i32_28 = arith.constant 17 : i32
    %60 = tpu.dynamic_rotate %59 by %c17_i32_28 dim 1 : vector<16x256xf32>, i32 -> vector<16x256xf32>
    %c0_29 = arith.constant 0 : index
    %c0_30 = arith.constant 0 : index
    %61 = vector.load %arg6[%c0_29, %c0_30] : memref<8x256xf32, #tpu.memory_space<vmem>>, vector<1x256xf32>
    %62 = vector.broadcast %61 : vector<1x256xf32> to vector<16x256xf32>
    %63 = arith.mulf %60, %62 : vector<16x256xf32>
    %64 = arith.truncf %63 : vector<16x256xf32> to vector<16x256xbf16>
    %c0_31 = arith.constant 0 : index
    %c0_32 = arith.constant 0 : index
    %65 = vector.load %arg8[%c0_31, %c0_32] : memref<144x256xbf16, #tpu.memory_space<vmem>>, vector<16x256xbf16>
    tpu.vector_store %arg8[%c0_31, %c0_32], %64 {strides = array<i32>} : memref<144x256xbf16, #tpu.memory_space<vmem>>, vector<16x256xbf16>,
    %c16_i32_33 = arith.constant 16 : i32
    %66 = tpu.dynamic_rotate %59 by %c16_i32_33 dim 1 : vector<16x256xf32>, i32 -> vector<16x256xf32>
    %c1_34 = arith.constant 1 : index
    %c0_35 = arith.constant 0 : index
    %67 = vector.load %arg6[%c1_34, %c0_35] : memref<8x256xf32, #tpu.memory_space<vmem>>, vector<1x256xf32>
    %68 = vector.broadcast %67 : vector<1x256xf32> to vector<16x256xf32>
    %69 = arith.mulf %66, %68 : vector<16x256xf32>
    %70 = arith.truncf %69 : vector<16x256xf32> to vector<16x256xbf16>
    %c16_36 = arith.constant 16 : index
    %c0_37 = arith.constant 0 : index
    %71 = vector.load %arg8[%c16_36, %c0_37] : memref<144x256xbf16, #tpu.memory_space<vmem>>, vector<16x256xbf16>
    tpu.vector_store %arg8[%c16_36, %c0_37], %70 {strides = array<i32>} : memref<144x256xbf16, #tpu.memory_space<vmem>>, vector<16x256xbf16>,
    %c15_i32_38 = arith.constant 15 : i32
    %72 = tpu.dynamic_rotate %59 by %c15_i32_38 dim 1 : vector<16x256xf32>, i32 -> vector<16x256xf32>
    %c2_39 = arith.constant 2 : index
    %c0_40 = arith.constant 0 : index
    %73 = vector.load %arg6[%c2_39, %c0_40] : memref<8x256xf32, #tpu.memory_space<vmem>>, vector<1x256xf32>
    %74 = vector.broadcast %73 : vector<1x256xf32> to vector<16x256xf32>
    %75 = arith.mulf %72, %74 : vector<16x256xf32>
    %76 = arith.truncf %75 : vector<16x256xf32> to vector<16x256xbf16>
    %c32_41 = arith.constant 32 : index
    %c0_42 = arith.constant 0 : index
    %77 = vector.load %arg8[%c32_41, %c0_42] : memref<144x256xbf16, #tpu.memory_space<vmem>>, vector<16x256xbf16>
    tpu.vector_store %arg8[%c32_41, %c0_42], %76 {strides = array<i32>} : memref<144x256xbf16, #tpu.memory_space<vmem>>, vector<16x256xbf16>,
    %c1_i32_43 = arith.constant 1 : i32
    %78 = tpu.dynamic_rotate %59 by %c1_i32_43 dim 1 : vector<16x256xf32>, i32 -> vector<16x256xf32>
    %c3_44 = arith.constant 3 : index
    %c0_45 = arith.constant 0 : index
    %79 = vector.load %arg6[%c3_44, %c0_45] : memref<8x256xf32, #tpu.memory_space<vmem>>, vector<1x256xf32>
    %80 = vector.broadcast %79 : vector<1x256xf32> to vector<16x256xf32>
    %81 = arith.mulf %78, %80 : vector<16x256xf32>
    %82 = arith.truncf %81 : vector<16x256xf32> to vector<16x256xbf16>
    %c48_46 = arith.constant 48 : index
    %c0_47 = arith.constant 0 : index
    %83 = vector.load %arg8[%c48_46, %c0_47] : memref<144x256xbf16, #tpu.memory_space<vmem>>, vector<16x256xbf16>
    tpu.vector_store %arg8[%c48_46, %c0_47], %82 {strides = array<i32>} : memref<144x256xbf16, #tpu.memory_space<vmem>>, vector<16x256xbf16>,
    %84 = arith.truncf %59 : vector<16x256xf32> to vector<16x256xbf16>
    %c64_48 = arith.constant 64 : index
    %c0_49 = arith.constant 0 : index
    %85 = vector.load %arg8[%c64_48, %c0_49] : memref<144x256xbf16, #tpu.memory_space<vmem>>, vector<16x256xbf16>
    tpu.vector_store %arg8[%c64_48, %c0_49], %84 {strides = array<i32>} : memref<144x256xbf16, #tpu.memory_space<vmem>>, vector<16x256xbf16>,
    %c255_i32_50 = arith.constant 255 : i32
    %86 = tpu.dynamic_rotate %59 by %c255_i32_50 dim 1 : vector<16x256xf32>, i32 -> vector<16x256xf32>
    %c4_51 = arith.constant 4 : index
    %c0_52 = arith.constant 0 : index
    %87 = vector.load %arg6[%c4_51, %c0_52] : memref<8x256xf32, #tpu.memory_space<vmem>>, vector<1x256xf32>
    %88 = vector.broadcast %87 : vector<1x256xf32> to vector<16x256xf32>
    %89 = arith.mulf %86, %88 : vector<16x256xf32>
    %90 = arith.truncf %89 : vector<16x256xf32> to vector<16x256xbf16>
    %c80_53 = arith.constant 80 : index
    %c0_54 = arith.constant 0 : index
    %91 = vector.load %arg8[%c80_53, %c0_54] : memref<144x256xbf16, #tpu.memory_space<vmem>>, vector<16x256xbf16>
    tpu.vector_store %arg8[%c80_53, %c0_54], %90 {strides = array<i32>} : memref<144x256xbf16, #tpu.memory_space<vmem>>, vector<16x256xbf16>,
    %c241_i32_55 = arith.constant 241 : i32
    %92 = tpu.dynamic_rotate %59 by %c241_i32_55 dim 1 : vector<16x256xf32>, i32 -> vector<16x256xf32>
    %c5_56 = arith.constant 5 : index
    %c0_57 = arith.constant 0 : index
    %93 = vector.load %arg6[%c5_56, %c0_57] : memref<8x256xf32, #tpu.memory_space<vmem>>, vector<1x256xf32>
    %94 = vector.broadcast %93 : vector<1x256xf32> to vector<16x256xf32>
    %95 = arith.mulf %92, %94 : vector<16x256xf32>
    %96 = arith.truncf %95 : vector<16x256xf32> to vector<16x256xbf16>
    %c96_58 = arith.constant 96 : index
    %c0_59 = arith.constant 0 : index
    %97 = vector.load %arg8[%c96_58, %c0_59] : memref<144x256xbf16, #tpu.memory_space<vmem>>, vector<16x256xbf16>
    tpu.vector_store %arg8[%c96_58, %c0_59], %96 {strides = array<i32>} : memref<144x256xbf16, #tpu.memory_space<vmem>>, vector<16x256xbf16>,
    %c240_i32_60 = arith.constant 240 : i32
    %98 = tpu.dynamic_rotate %59 by %c240_i32_60 dim 1 : vector<16x256xf32>, i32 -> vector<16x256xf32>
    %c6_61 = arith.constant 6 : index
    %c0_62 = arith.constant 0 : index
    %99 = vector.load %arg6[%c6_61, %c0_62] : memref<8x256xf32, #tpu.memory_space<vmem>>, vector<1x256xf32>
    %100 = vector.broadcast %99 : vector<1x256xf32> to vector<16x256xf32>
    %101 = arith.mulf %98, %100 : vector<16x256xf32>
    %102 = arith.truncf %101 : vector<16x256xf32> to vector<16x256xbf16>
    %c112_63 = arith.constant 112 : index
    %c0_64 = arith.constant 0 : index
    %103 = vector.load %arg8[%c112_63, %c0_64] : memref<144x256xbf16, #tpu.memory_space<vmem>>, vector<16x256xbf16>
    tpu.vector_store %arg8[%c112_63, %c0_64], %102 {strides = array<i32>} : memref<144x256xbf16, #tpu.memory_space<vmem>>, vector<16x256xbf16>,
    %c239_i32_65 = arith.constant 239 : i32
    %104 = tpu.dynamic_rotate %59 by %c239_i32_65 dim 1 : vector<16x256xf32>, i32 -> vector<16x256xf32>
    %c7_66 = arith.constant 7 : index
    %c0_67 = arith.constant 0 : index
    %105 = vector.load %arg6[%c7_66, %c0_67] : memref<8x256xf32, #tpu.memory_space<vmem>>, vector<1x256xf32>
    %106 = vector.broadcast %105 : vector<1x256xf32> to vector<16x256xf32>
    %107 = arith.mulf %104, %106 : vector<16x256xf32>
    %108 = arith.truncf %107 : vector<16x256xf32> to vector<16x256xbf16>
    %c128_68 = arith.constant 128 : index
    %c0_69 = arith.constant 0 : index
    %109 = vector.load %arg8[%c128_68, %c0_69] : memref<144x256xbf16, #tpu.memory_space<vmem>>, vector<16x256xbf16>
    tpu.vector_store %arg8[%c128_68, %c0_69], %108 {strides = array<i32>} : memref<144x256xbf16, #tpu.memory_space<vmem>>, vector<16x256xbf16>,
    %c0_70 = arith.constant 0 : index
    %c0_71 = arith.constant 0 : index
    %110 = vector.load %arg4[%c0_70, %c0_71] : memref<16x144xbf16, #tpu.memory_space<vmem>>, vector<16x144xbf16>
    %c0_72 = arith.constant 0 : index
    %c0_73 = arith.constant 0 : index
    %111 = vector.load %arg8[%c0_72, %c0_73] : memref<144x256xbf16, #tpu.memory_space<vmem>>, vector<144x256xbf16>
    %cst_74 = arith.constant dense<0.000000e+00> : vector<16x256xf32>
    %112 = tpu.matmul %110, %111, %cst_74 {dimension_numbers = #tpu.dot_dimension_numbers<[1], [0], [0], [1], [0, 0, 1, 1], [], []>} : vector<16x144xbf16>, vector<144x256xbf16>, vector<16x256xf32> -> vector<16x256xf32>
    %c0_75 = arith.constant 0 : index
    %c0_76 = arith.constant 0 : index
    %113 = vector.load %arg5[%c0_75, %c0_76] : memref<16x1xf32, #tpu.memory_space<vmem>>, vector<16x1xf32>
    %114 = vector.broadcast %113 : vector<16x1xf32> to vector<16x256xf32>
    %115 = arith.addf %112, %114 : vector<16x256xf32>
    %116 = arith.addf %115, %59 : vector<16x256xf32>
    %cst_77 = arith.constant 0.000000e+00 : f32
    %117 = vector.broadcast %cst_77 : f32 to vector<16x256xf32>
    %118 = arith.maximumf %116, %117 : vector<16x256xf32>
    %c0_78 = arith.constant 0 : index
    %c0_79 = arith.constant 0 : index
    %c0_80 = arith.constant 0 : index
    %119 = vector.load %arg7[%c0_78, %c0_79, %c0_80] : memref<1x16x256xf32, #tpu.memory_space<vmem>>, vector<1x16x256xf32>
    %120 = vector.shape_cast %119 : vector<1x16x256xf32> to vector<16x256xf32>
    %121 = vector.shape_cast %118 : vector<16x256xf32> to vector<1x16x256xf32>
    tpu.vector_store %arg7[%c0_78, %c0_79, %c0_80], %121 {strides = array<i32>} : memref<1x16x256xf32, #tpu.memory_space<vmem>>, vector<1x16x256xf32>,
    return
  }
  func.func @transform_0(%arg0: i32) -> (i32, i32, i32) {
    %c0_i32 = arith.constant 0 : i32
    %c0_i32_0 = arith.constant 0 : i32
    %c0_i32_1 = arith.constant 0 : i32
    return %arg0, %c0_i32, %c0_i32_0 : i32, i32, i32
  }
  func.func @transform_1(%arg0: i32) -> (i32, i32) {
    %c0_i32 = arith.constant 0 : i32
    %c0_i32_0 = arith.constant 0 : i32
    %c0_i32_1 = arith.constant 0 : i32
    return %c0_i32, %c0_i32_0 : i32, i32
  }
  func.func @transform_2(%arg0: i32) -> (i32, i32) {
    %c0_i32 = arith.constant 0 : i32
    %c0_i32_0 = arith.constant 0 : i32
    %c0_i32_1 = arith.constant 0 : i32
    return %c0_i32, %c0_i32_0 : i32, i32
  }
  func.func @transform_3(%arg0: i32) -> (i32, i32) {
    %c0_i32 = arith.constant 0 : i32
    %c0_i32_0 = arith.constant 0 : i32
    %c0_i32_1 = arith.constant 0 : i32
    return %c0_i32, %c0_i32_0 : i32, i32
  }
  func.func @transform_4(%arg0: i32) -> (i32, i32) {
    %c0_i32 = arith.constant 0 : i32
    %c0_i32_0 = arith.constant 0 : i32
    %c0_i32_1 = arith.constant 0 : i32
    return %c0_i32, %c0_i32_0 : i32, i32
  }
  func.func @transform_5(%arg0: i32) -> (i32, i32) {
    %c0_i32 = arith.constant 0 : i32
    %c0_i32_0 = arith.constant 0 : i32
    %c0_i32_1 = arith.constant 0 : i32
    return %c0_i32, %c0_i32_0 : i32, i32
  }
  func.func @transform_6(%arg0: i32) -> (i32, i32, i32) {
    %c0_i32 = arith.constant 0 : i32
    %c0_i32_0 = arith.constant 0 : i32
    %c0_i32_1 = arith.constant 0 : i32
    return %arg0, %c0_i32, %c0_i32_0 : i32, i32, i32
  }
}

</mosaic_0001>

<llo_original>
// kernel: resblock_forward.1
$region0: #{resblock_forward.1}
  #allocation0 [shape = 'u32[]', space=smem, size = 0x4, offset = 0x4, fixed_abs, tag = 'smem constant byte address 0x4 - core index']
  #allocation1 [shape = 'u32[144,128]{1,0:T(1,128)}', space=vmem, size = 0x12000, scoped, tag = 'internal scratch']
  #allocation2 [shape = 'bf16[144,256]{1,0:T(8,128)(2,1)}', space=vmem, size = 0x12000, scoped, tag = 'scratch operand']
  %s0 = inlined_call_operand.vmem [shape: f32[2,16,256], index: 0, kind: input, shape index: {}]
  %s1 = inlined_call_operand.vmem [shape: bf16[16,144], index: 1, kind: input, shape index: {}]
  %s2 = inlined_call_operand.vmem [shape: f32[16,1], index: 2, kind: input, shape index: {}]
  %s3 = inlined_call_operand.vmem [shape: bf16[16,144], index: 3, kind: input, shape index: {}]
  %s4 = inlined_call_operand.vmem [shape: f32[16,1], index: 4, kind: input, shape index: {}]
  %s5 = inlined_call_operand.vmem [shape: f32[8,256], index: 5, kind: input, shape index: {}]
  %s6 = inlined_call_operand.vmem [shape: f32[2,16,256], index: 6, kind: output, shape index: {}]
  %s7 = sld [smem:[#allocation0]]
  $region57: #{resblock_forward.1} parent=0
    _
  %s9 = ssub.s32 1, %s7
  %s10 = scalar_select 0, %s9, %s7
  loop: start=0, step=1, limit=4
  $region2: #{resblock_forward.1} parent=0 // loop_pre_header
    _
  $region3: #{resblock_forward.1} parent=0 // loop_header
    %s12 = sphi 0, %s16
    %p13 = scmp.ge.s32.totalorder %s12, 4
    %s22 = sphi 0, %s24
    %s25 = sphi 0, %s22
    %s26 = sphi 0, %s25
    %s42 = sphi 0, %s26
    %s46 = sphi 0, %s46
    %s48 = sphi 0, %s46
    %s49 = sphi 0, %s48
    %s63 = sphi 0, %s49
    %s67 = sphi 0, %s67
    %s69 = sphi 0, %s67
    %s70 = sphi 0, %s69
    %s84 = sphi 0, %s70
    %s88 = sphi 0, %s88
    %s90 = sphi 0, %s88
    %s91 = sphi 0, %s90
    %s105 = sphi 0, %s91
    %s109 = sphi 0, %s109
    %s111 = sphi 0, %s109
    %s112 = sphi 0, %s111
    %s126 = sphi 0, %s112
    %s130 = sphi 0, %s130
    %s132 = sphi 0, %s130
    %s133 = sphi 0, %s132
    %s147 = sphi 0, %s133
    %s153 = sphi 0, %s155
    %s156 = sphi 0, %s153
    %s157 = sphi 0, %s156
    %s173 = sphi 0, %s157
  $region4: #{resblock_forward.1} parent=0 // loop_header_branch
    %15 = sbr.rel (%p13) target = $region8
  $region5: #{resblock_forward.1} parent=0 // loop_body
    %s17 = ssub.s32 %s12, 1
    %s18 = ssub.s32 %s12, 2
    %s19 = sadd.s32 %s12, 1
    %s20 = ssub.s32 %s12, %s19
    %p21 = scmp.eq.s32.totalorder %s20, 0
    %s23 = sadd.s32 %s22, 1
    %s24 = scalar_select %p21, %s22, %s23
    %p27 = pneg %p21
    %p28 = scmp.eq.s32.totalorder %s12, 1
    %p29 = por %p27, %p28
    %p30 = scmp.ne.s32.totalorder %s22, %s25
    %p31 = scmp.eq.s32.totalorder %s12, 0
    %p32 = por %p30, %p31
    %p33 = scmp.ne.s32.totalorder %s22, %s25
    %p34 = scmp.eq.s32.totalorder %s17, 1
    %p35 = por %p33, %p34
    %p36 = scmp.ne.s32.totalorder %s25, %s26
    %p37 = scmp.eq.s32.totalorder %s17, 0
    %p38 = por %p36, %p37
    %p39 = scmp.ne.s32.totalorder %s25, %s26
    %p40 = scmp.eq.s32.totalorder %s18, 1
    %p41 = por %p39, %p40
    %p43 = scmp.ne.s32.totalorder %s26, %s42
    %p44 = scmp.eq.s32.totalorder %s18, 0
    %p45 = por %p43, %p44
    %s47 = sadd.s32 %s46, 1
    %p50 = scmp.eq.s32.totalorder %s12, 1
    %p51 = scmp.ne.s32.totalorder %s46, %s48
    %p52 = scmp.eq.s32.totalorder %s12, 0
    %p53 = por %p51, %p52
    %p54 = scmp.ne.s32.totalorder %s46, %s48
    %p55 = scmp.eq.s32.totalorder %s17, 1
    %p56 = por %p54, %p55
    %p57 = scmp.ne.s32.totalorder %s48, %s49
    %p58 = scmp.eq.s32.totalorder %s17, 0
    %p59 = por %p57, %p58
    %p60 = scmp.ne.s32.totalorder %s48, %s49
    %p61 = scmp.eq.s32.totalorder %s18, 1
    %p62 = por %p60, %p61
    %p64 = scmp.ne.s32.totalorder %s49, %s63
    %p65 = scmp.eq.s32.totalorder %s18, 0
    %p66 = por %p64, %p65
    %s68 = sadd.s32 %s67, 1
    %p71 = scmp.eq.s32.totalorder %s12, 1
    %p72 = scmp.ne.s32.totalorder %s67, %s69
    %p73 = scmp.eq.s32.totalorder %s12, 0
    %p74 = por %p72, %p73
    %p75 = scmp.ne.s32.totalorder %s67, %s69
    %p76 = scmp.eq.s32.totalorder %s17, 1
    %p77 = por %p75, %p76
    %p78 = scmp.ne.s32.totalorder %s69, %s70
    %p79 = scmp.eq.s32.totalorder %s17, 0
    %p80 = por %p78, %p79
    %p81 = scmp.ne.s32.totalorder %s69, %s70
    %p82 = scmp.eq.s32.totalorder %s18, 1
    %p83 = por %p81, %p82
    %p85 = scmp.ne.s32.totalorder %s70, %s84
    %p86 = scmp.eq.s32.totalorder %s18, 0
    %p87 = por %p85, %p86
    %s89 = sadd.s32 %s88, 1
    %p92 = scmp.eq.s32.totalorder %s12, 1
    %p93 = scmp.ne.s32.totalorder %s88, %s90
    %p94 = scmp.eq.s32.totalorder %s12, 0
    %p95 = por %p93, %p94
    %p96 = scmp.ne.s32.totalorder %s88, %s90
    %p97 = scmp.eq.s32.totalorder %s17, 1
    %p98 = por %p96, %p97
    %p99 = scmp.ne.s32.totalorder %s90, %s91
    %p100 = scmp.eq.s32.totalorder %s17, 0
    %p101 = por %p99, %p100
    %p102 = scmp.ne.s32.totalorder %s90, %s91
    %p103 = scmp.eq.s32.totalorder %s18, 1
    %p104 = por %p102, %p103
    %p106 = scmp.ne.s32.totalorder %s91, %s105
    %p107 = scmp.eq.s32.totalorder %s18, 0
    %p108 = por %p106, %p107
    %s110 = sadd.s32 %s109, 1
    %p113 = scmp.eq.s32.totalorder %s12, 1
    %p114 = scmp.ne.s32.totalorder %s109, %s111
    %p115 = scmp.eq.s32.totalorder %s12, 0
    %p116 = por %p114, %p115
    %p117 = scmp.ne.s32.totalorder %s109, %s111
    %p118 = scmp.eq.s32.totalorder %s17, 1
    %p119 = por %p117, %p118
    %p120 = scmp.ne.s32.totalorder %s111, %s112
    %p121 = scmp.eq.s32.totalorder %s17, 0
    %p122 = por %p120, %p121
    %p123 = scmp.ne.s32.totalorder %s111, %s112
    %p124 = scmp.eq.s32.totalorder %s18, 1
    %p125 = por %p123, %p124
    %p127 = scmp.ne.s32.totalorder %s112, %s126
    %p128 = scmp.eq.s32.totalorder %s18, 0
    %p129 = por %p127, %p128
    %s131 = sadd.s32 %s130, 1
    %p134 = scmp.eq.s32.totalorder %s12, 1
    %p135 = scmp.ne.s32.totalorder %s130, %s132
    %p136 = scmp.eq.s32.totalorder %s12, 0
    %p137 = por %p135, %p136
    %p138 = scmp.ne.s32.totalorder %s130, %s132
    %p139 = scmp.eq.s32.totalorder %s17, 1
    %p140 = por %p138, %p139
    %p141 = scmp.ne.s32.totalorder %s132, %s133
    %p142 = scmp.eq.s32.totalorder %s17, 0
    %p143 = por %p141, %p142
    %p144 = scmp.ne.s32.totalorder %s132, %s133
    %p145 = scmp.eq.s32.totalorder %s18, 1
    %p146 = por %p144, %p145
    %p148 = scmp.ne.s32.totalorder %s133, %s147
    %p149 = scmp.eq.s32.totalorder %s18, 0
    %p150 = por %p148, %p149
    %s151 = ssub.s32 %s12, %s19
    %p152 = scmp.eq.s32.totalorder %s151, 0
    %s154 = sadd.s32 %s153, 1
    %s155 = scalar_select %p152, %s153, %s154
    %p158 = pneg %p152
    %p159 = scmp.eq.s32.totalorder %s12, 1
    %p160 = por %p158, %p159
    %p161 = scmp.ne.s32.totalorder %s153, %s156
    %p162 = scmp.eq.s32.totalorder %s12, 0
    %p163 = por %p161, %p162
    %p164 = scmp.ne.s32.totalorder %s153, %s156
    %p165 = scmp.eq.s32.totalorder %s17, 1
    %p166 = por %p164, %p165
    %p167 = scmp.ne.s32.totalorder %s156, %s157
    %p168 = scmp.eq.s32.totalorder %s17, 0
    %p169 = por %p167, %p168
    %p170 = scmp.ne.s32.totalorder %s156, %s157
    %p171 = scmp.eq.s32.totalorder %s18, 1
    %p172 = por %p170, %p171
    %p174 = scmp.ne.s32.totalorder %s157, %s173
    %p175 = scmp.eq.s32.totalorder %s18, 0
    %p176 = por %p174, %p175
    %p177 = scmp.le.s32.totalorder 1, %s12
    %p178 = scmp.lt.s32.totalorder %s12, 3
    %p179 = pnand %p177, %p178
    %p180 = pneg %p179
    // Predicated region
    $region9: #{resblock_forward.1} parent=5 // pred_check
      _
    $region10: #{resblock_forward.1} parent=5 // pred_check_branch
      %182 = sbr.rel (%p179) target = $region12
    $region11: #{resblock_forward.1} parent=5 // pred_region
      %s183 = ssub.s32 %s12, 1
      // Predicated region
      $region13: #{resblock_forward.1} parent=11 // pred_check
        %p184 = pneg %p59
      $region14: #{resblock_forward.1} parent=11 // pred_check_branch
        %186 = sbr.rel (%p184) target = $region16
      $region15: #{resblock_forward.1} parent=11 // pred_region
        _
      $region16: #{resblock_forward.1} parent=11 // pred_fallthru
        _
      // Predicated region
      $region17: #{resblock_forward.1} parent=11 // pred_check
        %p187 = pneg %p80
      $region18: #{resblock_forward.1} parent=11 // pred_check_branch
        %189 = sbr.rel (%p187) target = $region20
      $region19: #{resblock_forward.1} parent=11 // pred_region
        _
      $region20: #{resblock_forward.1} parent=11 // pred_fallthru
        _
      // Predicated region
      $region21: #{resblock_forward.1} parent=11 // pred_check
        %p190 = pneg %p101
      $region22: #{resblock_forward.1} parent=11 // pred_check_branch
        %192 = sbr.rel (%p190) target = $region24
      $region23: #{resblock_forward.1} parent=11 // pred_region
        _
      $region24: #{resblock_forward.1} parent=11 // pred_fallthru
        _
      // Predicated region
      $region25: #{resblock_forward.1} parent=11 // pred_check
        %p193 = pneg %p122
      $region26: #{resblock_forward.1} parent=11 // pred_check_branch
        %195 = sbr.rel (%p193) target = $region28
      $region27: #{resblock_forward.1} parent=11 // pred_region
        _
      $region28: #{resblock_forward.1} parent=11 // pred_fallthru
        _
      // Predicated region
      $region29: #{resblock_forward.1} parent=11 // pred_check
        %p196 = pneg %p143
      $region30: #{resblock_forward.1} parent=11 // pred_check_branch
        %198 = sbr.rel (%p196) target = $region32
      $region31: #{resblock_forward.1} parent=11 // pred_region
        _
      $region32: #{resblock_forward.1} parent=11 // pred_fallthru
        _
    $region12: #{resblock_forward.1} parent=5 // pred_fallthru
      _
    %p199 = scmp.lt.s32.totalorder %s12, 2
    // Predicated region
    $region33: #{resblock_forward.1} parent=5 // pred_check
      %p200 = pneg %p199
    $region34: #{resblock_forward.1} parent=5 // pred_check_branch
      %202 = sbr.rel (%p200) target = $region36
    $region35: #{resblock_forward.1} parent=5 // pred_region
      // Predicated region
      $region37: #{resblock_forward.1} parent=35 // pred_check
        %p203 = pneg %p32
      $region38: #{resblock_forward.1} parent=35 // pred_check_branch
        %205 = sbr.rel (%p203) target = $region40
      $region39: #{resblock_forward.1} parent=35 // pred_region
        %p206 = scmp.lt.s32.totalorder %s12, 1
        %s207 = scalar_select %p206, %s12, 1
        %s208 = smul.addr %s207, 4
        %s209 = smul.addr %s208, 8
        %s210 = scalar_lea.vmem %s0, %s209
      $region40: #{resblock_forward.1} parent=35 // pred_fallthru
        _
    $region36: #{resblock_forward.1} parent=5 // pred_fallthru
      _
    %p211 = scmp.le.s32.totalorder 1, %s12
    %p212 = scmp.lt.s32.totalorder %s12, 3
    %p213 = pnand %p211, %p212
    %p214 = pneg %p213
    // Predicated region
    $region41: #{resblock_forward.1} parent=5 // pred_check
      _
    $region42: #{resblock_forward.1} parent=5 // pred_check_branch
      %216 = sbr.rel (%p213) target = $region44
    $region43: #{resblock_forward.1} parent=5 // pred_region
      %s217 = ssub.s32 %s12, 1
      %p218 = scmp.lt.s32.totalorder %s17, 1
      %s219 = scalar_select %p218, %s17, 1
      %s220 = smul.addr %s219, 4
      %s221 = smul.addr %s220, 8
      %s222 = scalar_lea.vmem %s0, %s221
      %p223 = pneg %p38
      %p224 = pneg %p35
      %p225 = pneg %p59
      %p226 = pneg %p56
      %p227 = pneg %p80
      %p228 = pneg %p77
      %p229 = pneg %p101
      %p230 = pneg %p98
      %p231 = pneg %p122
      %p232 = pneg %p119
      %p233 = pneg %p143
      %p234 = pneg %p140
      %p235 = pneg %p169
      %p236 = pneg %p166
      %p237 = scmp.lt.s32.totalorder %s17, 1
      %s238 = scalar_select %p237, %s17, 1
      %s239 = smul.addr %s238, 4
      %s240 = smul.addr %s239, 8
      %s241 = scalar_lea.vmem %s6, %s240
      %p242 = scmp.lt.s32.totalorder %s17, 1
      %s243 = scalar_select %p242, %s17, 1
      %s244 = smul.addr %s243, 4
      %s245 = smul.addr %s244, 8
      %s246 = scalar_lea.vmem %s0, %s245
      %p247 = scmp.lt.s32.totalorder %s17, 1
      %s248 = scalar_select %p247, %s17, 1
      %s249 = smul.addr %s248, 4
      %s250 = smul.addr %s249, 8
      %s251 = scalar_lea.vmem %s6, %s250
      %v253 = vld [vmem:[%s246] sm:$0xff]
      %v254 = vld [vmem:[%s246 + $0x8] sm:$0xff]
      %v255 = vld [vmem:[%s246 + $0x10] sm:$0xff]
      %v256 = vld [vmem:[%s246 + $0x18] sm:$0xff]
      %257 = vrot.lane.b32.xlu0 %v253, 17
      %v258 = vpop.permute.xlu0 %257
      %259 = vrot.lane.b32.xlu0 %v255, 17
      %v260 = vpop.permute.xlu0 %259
      %261 = vrot.lane.b32.xlu0 %v254, 17
      %v262 = vpop.permute.xlu0 %261
      %263 = vrot.lane.b32.xlu0 %v256, 17
      %v264 = vpop.permute.xlu0 %263
      %v265 = vlaneseq
      %v266 = vand.u32 %v265, 127
      %vm267 = vcmp.lt.s32.totalorder %v266, 17
      %v268 = vsel %vm267, %v258, %v262
      %v269 = vsel %vm267, %v260, %v264
      %v270 = vsel %vm267, %v262, %v258
      %v271 = vsel %vm267, %v264, %v260
      %v272 = vld [vmem:[%s5] ss:$8 sm:$0x3]
      %v274 = vlaneseq
      %v275 = vshrl.u32 %v274, 7
      %v276 = vsub.s32 0, %v275
      %v277 = vrot.slane %v272, %v276
      %v278 = vlaneseq
      %v279 = vshrl.u32 %v278, 7
      %v280 = vsub.s32 1, %v279
      %v281 = vrot.slane %v272, %v280
      %v284 = vmul.f32 %v270, %v277
      %v285 = vmul.f32 %v268, %v281
      %v286 = vmul.f32 %v271, %v277
      %v287 = vmul.f32 %v269, %v281
      %v288 = vpack.c.bf16 %v286, %v284
      %v289 = vpack.c.bf16 %v287, %v285
      %v292 = vunpack.c.l.b16 %v288
      %v293 = vunpack.c.l.b16 %v289
      %v294 = vunpack.c.h.b16 %v288
      %v295 = vunpack.c.h.b16 %v289
      %v296 = vpack.c.b16 %v293, %v292
      %v297 = vpack.c.b16 %v295, %v294
      %300 = vst [vmem:[#allocation2] sm:$0xff] %v296
      %301 = vst [vmem:[#allocation2 + $0x8] sm:$0xff] %v297
      %302 = vrot.lane.b32.xlu0 %v253, 16
      %v303 = vpop.permute.xlu0 %302
      %304 = vrot.lane.b32.xlu0 %v255, 16
      %v305 = vpop.permute.xlu0 %304
      %306 = vrot.lane.b32.xlu0 %v254, 16
      %v307 = vpop.permute.xlu0 %306
      %308 = vrot.lane.b32.xlu0 %v256, 16
      %v309 = vpop.permute.xlu0 %308
      %vm310 = vcmp.lt.s32.totalorder %v266, 16
      %v311 = vsel %vm310, %v303, %v307
      %v312 = vsel %vm310, %v305, %v309
      %v313 = vsel %vm310, %v307, %v303
      %v314 = vsel %vm310, %v309, %v305
      %s315 = scalar_lea.vmem %s5, 1
      %v316 = vld [vmem:[%s315] ss:$8 sm:$0x3]
      %v318 = vlaneseq
      %v319 = vshrl.u32 %v318, 7
      %v320 = vsub.s32 0, %v319
      %v321 = vrot.slane %v316, %v320
      %v322 = vlaneseq
      %v323 = vshrl.u32 %v322, 7
      %v324 = vsub.s32 1, %v323
      %v325 = vrot.slane %v316, %v324
      %v328 = vmul.f32 %v313, %v321
      %v329 = vmul.f32 %v311, %v325
      %v330 = vmul.f32 %v314, %v321
      %v331 = vmul.f32 %v312, %v325
      %v332 = vpack.c.bf16 %v330, %v328
      %v333 = vpack.c.bf16 %v331, %v329
      %v336 = vunpack.c.l.b16 %v332
      %v337 = vunpack.c.l.b16 %v333
      %v338 = vunpack.c.h.b16 %v332
      %v339 = vunpack.c.h.b16 %v333
      %v340 = vpack.c.b16 %v337, %v336
      %v341 = vpack.c.b16 %v339, %v338
      %344 = vst [vmem:[#allocation2 + $0x10] sm:$0xff] %v340
      %345 = vst [vmem:[#allocation2 + $0x18] sm:$0xff] %v341
      %346 = vrot.lane.b32.xlu0 %v253, 15
      %v347 = vpop.permute.xlu0 %346
      %348 = vrot.lane.b32.xlu0 %v255, 15
      %v349 = vpop.permute.xlu0 %348
      %350 = vrot.lane.b32.xlu0 %v254, 15
      %v351 = vpop.permute.xlu0 %350
      %352 = vrot.lane.b32.xlu0 %v256, 15
      %v353 = vpop.permute.xlu0 %352
      %vm354 = vcmp.lt.s32.totalorder %v266, 15
      %v355 = vsel %vm354, %v347, %v351
      %v356 = vsel %vm354, %v349, %v353
      %v357 = vsel %vm354, %v351, %v347
      %v358 = vsel %vm354, %v353, %v349
      %s359 = scalar_lea.vmem %s5, 2
      %v360 = vld [vmem:[%s359] ss:$8 sm:$0x3]
      %v362 = vlaneseq
      %v363 = vshrl.u32 %v362, 7
      %v364 = vsub.s32 0, %v363
      %v365 = vrot.slane %v360, %v364
      %v366 = vlaneseq
      %v367 = vshrl.u32 %v366, 7
      %v368 = vsub.s32 1, %v367
      %v369 = vrot.slane %v360, %v368
      %v372 = vmul.f32 %v357, %v365
      %v373 = vmul.f32 %v355, %v369
      %v374 = vmul.f32 %v358, %v365
      %v375 = vmul.f32 %v356, %v369
      %v376 = vpack.c.bf16 %v374, %v372
      %v377 = vpack.c.bf16 %v375, %v373
      %v380 = vunpack.c.l.b16 %v376
      %v381 = vunpack.c.l.b16 %v377
      %v382 = vunpack.c.h.b16 %v376
      %v383 = vunpack.c.h.b16 %v377
      %v384 = vpack.c.b16 %v381, %v380
      %v385 = vpack.c.b16 %v383, %v382
      %388 = vst [vmem:[#allocation2 + $0x20] sm:$0xff] %v384
      %389 = vst [vmem:[#allocation2 + $0x28] sm:$0xff] %v385
      %390 = vrot.lane.b32.xlu0 %v253, 1
      %v391 = vpop.permute.xlu0 %390
      %392 = vrot.lane.b32.xlu0 %v255, 1
      %v393 = vpop.permute.xlu0 %392
      %394 = vrot.lane.b32.xlu0 %v254, 1
      %v395 = vpop.permute.xlu0 %394
      %396 = vrot.lane.b32.xlu0 %v256, 1
      %v397 = vpop.permute.xlu0 %396
      %vm398 = vcmp.lt.s32.totalorder %v266, 1
      %v399 = vsel %vm398, %v391, %v395
      %v400 = vsel %vm398, %v393, %v397
      %v401 = vsel %vm398, %v395, %v391
      %v402 = vsel %vm398, %v397, %v393
      %s403 = scalar_lea.vmem %s5, 3
      %v404 = vld [vmem:[%s403] ss:$8 sm:$0x3]
      %v406 = vlaneseq
      %v407 = vshrl.u32 %v406, 7
      %v408 = vsub.s32 0, %v407
      %v409 = vrot.slane %v404, %v408
      %v410 = vlaneseq
      %v411 = vshrl.u32 %v410, 7
      %v412 = vsub.s32 1, %v411
      %v413 = vrot.slane %v404, %v412
      %v416 = vmul.f32 %v401, %v409
      %v417 = vmul.f32 %v399, %v413
      %v418 = vmul.f32 %v402, %v409
      %v419 = vmul.f32 %v400, %v413
      %v420 = vpack.c.bf16 %v418, %v416
      %v421 = vpack.c.bf16 %v419, %v417
      %v424 = vunpack.c.l.b16 %v420
      %v425 = vunpack.c.l.b16 %v421
      %v426 = vunpack.c.h.b16 %v420
      %v427 = vunpack.c.h.b16 %v421
      %v428 = vpack.c.b16 %v425, %v424
      %v429 = vpack.c.b16 %v427, %v426
      %432 = vst [vmem:[#allocation2 + $0x30] sm:$0xff] %v428
      %433 = vst [vmem:[#allocation2 + $0x38] sm:$0xff] %v429
      %v434 = vpack.c.bf16 %v255, %v253
      %v435 = vpack.c.bf16 %v256, %v254
      %v438 = vunpack.c.l.b16 %v434
      %v439 = vunpack.c.l.b16 %v435
      %v440 = vunpack.c.h.b16 %v434
      %v441 = vunpack.c.h.b16 %v435
      %v442 = vpack.c.b16 %v439, %v438
      %v443 = vpack.c.b16 %v441, %v440
      %446 = vst [vmem:[#allocation2 + $0x40] sm:$0xff] %v442
      %447 = vst [vmem:[#allocation2 + $0x48] sm:$0xff] %v443
      %448 = vrot.lane.b32.xlu0 %v253, 127
      %v449 = vpop.permute.xlu0 %448
      %450 = vrot.lane.b32.xlu0 %v255, 127
      %v451 = vpop.permute.xlu0 %450
      %452 = vrot.lane.b32.xlu0 %v254, 127
      %v453 = vpop.permute.xlu0 %452
      %454 = vrot.lane.b32.xlu0 %v256, 127
      %v455 = vpop.permute.xlu0 %454
      %vm456 = vcmp.lt.s32.totalorder %v266, 127
      %v457 = vsel %vm456, %v449, %v453
      %v458 = vsel %vm456, %v451, %v455
      %v459 = vsel %vm456, %v453, %v449
      %v460 = vsel %vm456, %v455, %v451
      %s461 = scalar_lea.vmem %s5, 4
      %v462 = vld [vmem:[%s461] ss:$8 sm:$0x3]
      %v464 = vlaneseq
      %v465 = vshrl.u32 %v464, 7
      %v466 = vsub.s32 0, %v465
      %v467 = vrot.slane %v462, %v466
      %v468 = vlaneseq
      %v469 = vshrl.u32 %v468, 7
      %v470 = vsub.s32 1, %v469
      %v471 = vrot.slane %v462, %v470
      %v474 = vmul.f32 %v457, %v467
      %v475 = vmul.f32 %v459, %v471
      %v476 = vmul.f32 %v458, %v467
      %v477 = vmul.f32 %v460, %v471
      %v478 = vpack.c.bf16 %v476, %v474
      %v479 = vpack.c.bf16 %v477, %v475
      %v482 = vunpack.c.l.b16 %v478
      %v483 = vunpack.c.l.b16 %v479
      %v484 = vunpack.c.h.b16 %v478
      %v485 = vunpack.c.h.b16 %v479
      %v486 = vpack.c.b16 %v483, %v482
      %v487 = vpack.c.b16 %v485, %v484
      %490 = vst [vmem:[#allocation2 + $0x50] sm:$0xff] %v486
      %491 = vst [vmem:[#allocation2 + $0x58] sm:$0xff] %v487
      %492 = vrot.lane.b32.xlu0 %v253, 113
      %v493 = vpop.permute.xlu0 %492
      %494 = vrot.lane.b32.xlu0 %v255, 113
      %v495 = vpop.permute.xlu0 %494
      %496 = vrot.lane.b32.xlu0 %v254, 113
      %v497 = vpop.permute.xlu0 %496
      %498 = vrot.lane.b32.xlu0 %v256, 113
      %v499 = vpop.permute.xlu0 %498
      %vm500 = vcmp.lt.s32.totalorder %v266, 113
      %v501 = vsel %vm500, %v493, %v497
      %v502 = vsel %vm500, %v495, %v499
      %v503 = vsel %vm500, %v497, %v493
      %v504 = vsel %vm500, %v499, %v495
      %s505 = scalar_lea.vmem %s5, 5
      %v506 = vld [vmem:[%s505] ss:$8 sm:$0x3]
      %v508 = vlaneseq
      %v509 = vshrl.u32 %v508, 7
      %v510 = vsub.s32 0, %v509
      %v511 = vrot.slane %v506, %v510
      %v512 = vlaneseq
      %v513 = vshrl.u32 %v512, 7
      %v514 = vsub.s32 1, %v513
      %v515 = vrot.slane %v506, %v514
      %v518 = vmul.f32 %v501, %v511
      %v519 = vmul.f32 %v503, %v515
      %v520 = vmul.f32 %v502, %v511
      %v521 = vmul.f32 %v504, %v515
      %v522 = vpack.c.bf16 %v520, %v518
      %v523 = vpack.c.bf16 %v521, %v519
      %v526 = vunpack.c.l.b16 %v522
      %v527 = vunpack.c.l.b16 %v523
      %v528 = vunpack.c.h.b16 %v522
      %v529 = vunpack.c.h.b16 %v523
      %v530 = vpack.c.b16 %v527, %v526
      %v531 = vpack.c.b16 %v529, %v528
      %534 = vst [vmem:[#allocation2 + $0x60] sm:$0xff] %v530
      %535 = vst [vmem:[#allocation2 + $0x68] sm:$0xff] %v531
      %536 = vrot.lane.b32.xlu0 %v253, 112
      %v537 = vpop.permute.xlu0 %536
      %538 = vrot.lane.b32.xlu0 %v255, 112
      %v539 = vpop.permute.xlu0 %538
      %540 = vrot.lane.b32.xlu0 %v254, 112
      %v541 = vpop.permute.xlu0 %540
      %542 = vrot.lane.b32.xlu0 %v256, 112
      %v543 = vpop.permute.xlu0 %542
      %vm544 = vcmp.lt.s32.totalorder %v266, 112
      %v545 = vsel %vm544, %v537, %v541
      %v546 = vsel %vm544, %v539, %v543
      %v547 = vsel %vm544, %v541, %v537
      %v548 = vsel %vm544, %v543, %v539
      %s549 = scalar_lea.vmem %s5, 6
      %v550 = vld [vmem:[%s549] ss:$8 sm:$0x3]
      %v552 = vlaneseq
      %v553 = vshrl.u32 %v552, 7
      %v554 = vsub.s32 0, %v553
      %v555 = vrot.slane %v550, %v554
      %v556 = vlaneseq
      %v557 = vshrl.u32 %v556, 7
      %v558 = vsub.s32 1, %v557
      %v559 = vrot.slane %v550, %v558
      %v562 = vmul.f32 %v545, %v555
      %v563 = vmul.f32 %v547, %v559
      %v564 = vmul.f32 %v546, %v555
      %v565 = vmul.f32 %v548, %v559
      %v566 = vpack.c.bf16 %v564, %v562
      %v567 = vpack.c.bf16 %v565, %v563
      %v570 = vunpack.c.l.b16 %v566
      %v571 = vunpack.c.l.b16 %v567
      %v572 = vunpack.c.h.b16 %v566
      %v573 = vunpack.c.h.b16 %v567
      %v574 = vpack.c.b16 %v571, %v570
      %v575 = vpack.c.b16 %v573, %v572
      %578 = vst [vmem:[#allocation2 + $0x70] sm:$0xff] %v574
      %579 = vst [vmem:[#allocation2 + $0x78] sm:$0xff] %v575
      %580 = vrot.lane.b32.xlu0 %v253, 111
      %v581 = vpop.permute.xlu0 %580
      %582 = vrot.lane.b32.xlu0 %v255, 111
      %v583 = vpop.permute.xlu0 %582
      %584 = vrot.lane.b32.xlu0 %v254, 111
      %v585 = vpop.permute.xlu0 %584
      %586 = vrot.lane.b32.xlu0 %v256, 111
      %v587 = vpop.permute.xlu0 %586
      %vm588 = vcmp.lt.s32.totalorder %v266, 111
      %v589 = vsel %vm588, %v581, %v585
      %v590 = vsel %vm588, %v583, %v587
      %v591 = vsel %vm588, %v585, %v581
      %v592 = vsel %vm588, %v587, %v583
      %s593 = scalar_lea.vmem %s5, 7
      %v594 = vld [vmem:[%s593] ss:$8 sm:$0x3]
      %v596 = vlaneseq
      %v597 = vshrl.u32 %v596, 7
      %v598 = vsub.s32 0, %v597
      %v599 = vrot.slane %v594, %v598
      %v600 = vlaneseq
      %v601 = vshrl.u32 %v600, 7
      %v602 = vsub.s32 1, %v601
      %v603 = vrot.slane %v594, %v602
      %v606 = vmul.f32 %v589, %v599
      %v607 = vmul.f32 %v591, %v603
      %v608 = vmul.f32 %v590, %v599
      %v609 = vmul.f32 %v592, %v603
      %v610 = vpack.c.bf16 %v608, %v606
      %v611 = vpack.c.bf16 %v609, %v607
      %v614 = vunpack.c.l.b16 %v610
      %v615 = vunpack.c.l.b16 %v611
      %v616 = vunpack.c.h.b16 %v610
      %v617 = vunpack.c.h.b16 %v611
      %v618 = vpack.c.b16 %v615, %v614
      %v619 = vpack.c.b16 %v617, %v616
      %622 = vst [vmem:[#allocation2 + $0x80] sm:$0xff] %v618
      %623 = vst [vmem:[#allocation2 + $0x88] sm:$0xff] %v619
      %v624 = vld [vmem:[%s1] sm:$0xff]
      %v625 = vld [vmem:[%s1 + $0x8] sm:$0xff]
      %v626 = vld [vmem:[#allocation2] sm:$0xff]
      %v627 = vld [vmem:[#allocation2 + $0x8] sm:$0xff]
      %v628 = vld [vmem:[#allocation2 + $0x10] sm:$0xff]
      %v629 = vld [vmem:[#allocation2 + $0x18] sm:$0xff]
      %v630 = vld [vmem:[#allocation2 + $0x20] sm:$0xff]
      %v631 = vld [vmem:[#allocation2 + $0x28] sm:$0xff]
      %v632 = vld [vmem:[#allocation2 + $0x30] sm:$0xff]
      %v633 = vld [vmem:[#allocation2 + $0x38] sm:$0xff]
      %v634 = vld [vmem:[#allocation2 + $0x40] sm:$0xff]
      %v635 = vld [vmem:[#allocation2 + $0x48] sm:$0xff]
      %v636 = vld [vmem:[#allocation2 + $0x50] sm:$0xff]
      %v637 = vld [vmem:[#allocation2 + $0x58] sm:$0xff]
      %v638 = vld [vmem:[#allocation2 + $0x60] sm:$0xff]
      %v639 = vld [vmem:[#allocation2 + $0x68] sm:$0xff]
      %v640 = vld [vmem:[#allocation2 + $0x70] sm:$0xff]
      %v641 = vld [vmem:[#allocation2 + $0x78] sm:$0xff]
      %v642 = vld [vmem:[#allocation2 + $0x80] sm:$0xff]
      %v643 = vld [vmem:[#allocation2 + $0x88] sm:$0xff]
      %v644 = vld [vmem:[%s2] sm:$0xff]
      %v645 = vld [vmem:[%s2 + $0x8] sm:$0xff]
      %647 = vset.pattern.permute.xlu0 0
      %648 = vperm.xlu0 %647, %v644
      %v649 = vpop.permute.xlu0 %648
      %652 = vset.pattern.permute.xlu0 0
      %653 = vperm.xlu0 %652, %v645
      %v654 = vpop.permute.xlu0 %653
      %v658 = vunpack.c.l.b16 %v624
      %v659 = vunpack.c.h.b16 %v624
      %v660 = vunpack.c.l.b16 %v625
      %v661 = vunpack.c.h.b16 %v625
      %v662 = vpack.c.b16 %v660, %v658
      %v663 = vpack.c.b16 %v661, %v659
      %v683 = vunpack.c.l.b16 %v626
      %v684 = vunpack.c.h.b16 %v626
      %v685 = vunpack.c.l.b16 %v627
      %v686 = vunpack.c.h.b16 %v627
      %v687 = vunpack.c.l.b16 %v628
      %v688 = vunpack.c.h.b16 %v628
      %v689 = vunpack.c.l.b16 %v629
      %v690 = vunpack.c.h.b16 %v629
      %v691 = vunpack.c.l.b16 %v630
      %v692 = vunpack.c.h.b16 %v630
      %v693 = vunpack.c.l.b16 %v631
      %v694 = vunpack.c.h.b16 %v631
      %v695 = vunpack.c.l.b16 %v632
      %v696 = vunpack.c.h.b16 %v632
      %v697 = vunpack.c.l.b16 %v633
      %v698 = vunpack.c.h.b16 %v633
      %v699 = vunpack.c.l.b16 %v634
      %v700 = vunpack.c.h.b16 %v634
      %v701 = vunpack.c.l.b16 %v635
      %v702 = vunpack.c.h.b16 %v635
      %v703 = vunpack.c.l.b16 %v636
      %v704 = vunpack.c.h.b16 %v636
      %v705 = vunpack.c.l.b16 %v637
      %v706 = vunpack.c.h.b16 %v637
      %v707 = vunpack.c.l.b16 %v638
      %v708 = vunpack.c.h.b16 %v638
      %v709 = vunpack.c.l.b16 %v639
      %v710 = vunpack.c.h.b16 %v639
      %v711 = vunpack.c.l.b16 %v640
      %v712 = vunpack.c.h.b16 %v640
      %v713 = vunpack.c.l.b16 %v641
      %v714 = vunpack.c.h.b16 %v641
      %v715 = vunpack.c.l.b16 %v642
      %v716 = vunpack.c.h.b16 %v642
      %v717 = vunpack.c.l.b16 %v643
      %v718 = vunpack.c.h.b16 %v643
      %v719 = vpack.c.b16 %v685, %v683
      %v720 = vpack.c.b16 %v686, %v684
      %v721 = vpack.c.b16 %v689, %v687
      %v722 = vpack.c.b16 %v690, %v688
      %v723 = vpack.c.b16 %v693, %v691
      %v724 = vpack.c.b16 %v694, %v692
      %v725 = vpack.c.b16 %v697, %v695
      %v726 = vpack.c.b16 %v698, %v696
      %v727 = vpack.c.b16 %v701, %v699
      %v728 = vpack.c.b16 %v702, %v700
      %v729 = vpack.c.b16 %v705, %v703
      %v730 = vpack.c.b16 %v706, %v704
      %v731 = vpack.c.b16 %v709, %v707
      %v732 = vpack.c.b16 %v710, %v708
      %v733 = vpack.c.b16 %v713, %v711
      %v734 = vpack.c.b16 %v714, %v712
      %v735 = vpack.c.b16 %v717, %v715
      %v736 = vpack.c.b16 %v718, %v716
      %vm755 = vcmask 130048
      %v757 = vsel %vm755, %v663, 0
      %759 = vmatprep.subr.bf16.mxu0 %v734
      %760 = vmatpush1.bf16.msra.mxu0 %v733
      %761 = vmatprep.subr.bf16.mxu0 %v732
      %762 = vmatpush1.bf16.msra.mxu0 %v731
      %763 = vmatprep.subr.bf16.mxu0 %v730
      %764 = vmatpush1.bf16.msra.mxu0 %v729
      %765 = vmatprep.subr.bf16.mxu0 %v728
      %766 = vmatpush1.bf16.msra.mxu0 %v727
      %767 = vmatprep.subr.bf16.mxu0 %v726
      %768 = vmatpush1.bf16.msra.mxu0 %v725
      %769 = vmatprep.subr.bf16.mxu0 %v724
      %770 = vmatpush1.bf16.msra.mxu0 %v723
      %771 = vmatprep.subr.bf16.mxu0 %v722
      %772 = vmatpush1.bf16.msra.mxu0 %v721
      %773 = vmatprep.subr.bf16.mxu0 %v720
      %774 = vmatpush1.bf16.msra.mxu0 %v719
      %775 = vmatprep.subr.bf16.mxu0 0
      %776 = vmatpush2.bf16.msra.mxu0 0
      %777 = vmatprep.subr.bf16.mxu0 0
      %778 = vmatpush2.bf16.msra.mxu0 0
      %779 = vmatprep.subr.bf16.mxu0 0
      %780 = vmatpush2.bf16.msra.mxu0 0
      %781 = vmatprep.subr.bf16.mxu0 0
      %782 = vmatpush2.bf16.msra.mxu0 0
      %783 = vmatprep.subr.bf16.mxu0 0
      %784 = vmatpush2.bf16.msra.mxu0 0
      %785 = vmatprep.subr.bf16.mxu0 0
      %786 = vmatpush2.bf16.msra.mxu0 0
      %787 = vmatprep.subr.bf16.mxu0 0
      %788 = vmatpush2.bf16.msra.mxu0 0
      %789 = vmatprep.subr.bf16.mxu0 %v736
      %790 = vmatpush2.bf16.msra.mxu0 %v735
      %791 = vmatprep.mubr.bf16.mxu0 %v757
      %792 = vmatmul.mubr.bf16.gmra.mxu0 %v662
      %v793 = vpop.f32.mrf.mxu0
      %v794 = vadd.f32 %v649, %v793
      %v795 = vpop.f32.mrf.mxu0
      %v796 = vadd.f32 %v649, %v795
      %v797 = vpop.f32.mrf.mxu0
      %v798 = vadd.f32 %v654, %v797
      %v799 = vpop.f32.mrf.mxu0
      %v800 = vadd.f32 %v654, %v799
      %801 = vdwg.mxu0
      %v802 = vmax.f32 %v794, 0.0
      %v803 = vmax.f32 %v796, 0.0
      %v804 = vmax.f32 %v798, 0.0
      %v805 = vmax.f32 %v800, 0.0
      %806 = vrot.lane.b32.xlu0 %v802, 17
      %v807 = vpop.permute.xlu0 %806
      %808 = vrot.lane.b32.xlu0 %v804, 17
      %v809 = vpop.permute.xlu0 %808
      %810 = vrot.lane.b32.xlu0 %v803, 17
      %v811 = vpop.permute.xlu0 %810
      %812 = vrot.lane.b32.xlu0 %v805, 17
      %v813 = vpop.permute.xlu0 %812
      %v814 = vsel %vm267, %v807, %v811
      %v815 = vsel %vm267, %v809, %v813
      %v816 = vsel %vm267, %v811, %v807
      %v817 = vsel %vm267, %v813, %v809
      %v818 = vld [vmem:[%s5] ss:$8 sm:$0x3]
      %v820 = vlaneseq
      %v821 = vshrl.u32 %v820, 7
      %v822 = vsub.s32 0, %v821
      %v823 = vrot.slane %v818, %v822
      %v824 = vlaneseq
      %v825 = vshrl.u32 %v824, 7
      %v826 = vsub.s32 1, %v825
      %v827 = vrot.slane %v818, %v826
      %v830 = vmul.f32 %v816, %v823
      %v831 = vmul.f32 %v814, %v827
      %v832 = vmul.f32 %v817, %v823
      %v833 = vmul.f32 %v815, %v827
      %v834 = vpack.c.bf16 %v832, %v830
      %v835 = vpack.c.bf16 %v833, %v831
      %v838 = vunpack.c.l.b16 %v834
      %v839 = vunpack.c.l.b16 %v835
      %v840 = vunpack.c.h.b16 %v834
      %v841 = vunpack.c.h.b16 %v835
      %v842 = vpack.c.b16 %v839, %v838
      %v843 = vpack.c.b16 %v841, %v840
      %846 = vst [vmem:[#allocation2] sm:$0xff] %v842
      %847 = vst [vmem:[#allocation2 + $0x8] sm:$0xff] %v843
      %848 = vrot.lane.b32.xlu0 %v802, 16
      %v849 = vpop.permute.xlu0 %848
      %850 = vrot.lane.b32.xlu0 %v804, 16
      %v851 = vpop.permute.xlu0 %850
      %852 = vrot.lane.b32.xlu0 %v803, 16
      %v853 = vpop.permute.xlu0 %852
      %854 = vrot.lane.b32.xlu0 %v805, 16
      %v855 = vpop.permute.xlu0 %854
      %v856 = vsel %vm310, %v849, %v853
      %v857 = vsel %vm310, %v851, %v855
      %v858 = vsel %vm310, %v853, %v849
      %v859 = vsel %vm310, %v855, %v851
      %v860 = vld [vmem:[%s315] ss:$8 sm:$0x3]
      %v862 = vlaneseq
      %v863 = vshrl.u32 %v862, 7
      %v864 = vsub.s32 0, %v863
      %v865 = vrot.slane %v860, %v864
      %v866 = vlaneseq
      %v867 = vshrl.u32 %v866, 7
      %v868 = vsub.s32 1, %v867
      %v869 = vrot.slane %v860, %v868
      %v872 = vmul.f32 %v858, %v865
      %v873 = vmul.f32 %v856, %v869
      %v874 = vmul.f32 %v859, %v865
      %v875 = vmul.f32 %v857, %v869
      %v876 = vpack.c.bf16 %v874, %v872
      %v877 = vpack.c.bf16 %v875, %v873
      %v880 = vunpack.c.l.b16 %v876
      %v881 = vunpack.c.l.b16 %v877
      %v882 = vunpack.c.h.b16 %v876
      %v883 = vunpack.c.h.b16 %v877
      %v884 = vpack.c.b16 %v881, %v880
      %v885 = vpack.c.b16 %v883, %v882
      %888 = vst [vmem:[#allocation2 + $0x10] sm:$0xff] %v884
      %889 = vst [vmem:[#allocation2 + $0x18] sm:$0xff] %v885
      %890 = vrot.lane.b32.xlu0 %v802, 15
      %v891 = vpop.permute.xlu0 %890
      %892 = vrot.lane.b32.xlu0 %v804, 15
      %v893 = vpop.permute.xlu0 %892
      %894 = vrot.lane.b32.xlu0 %v803, 15
      %v895 = vpop.permute.xlu0 %894
      %896 = vrot.lane.b32.xlu0 %v805, 15
      %v897 = vpop.permute.xlu0 %896
      %v898 = vsel %vm354, %v891, %v895
      %v899 = vsel %vm354, %v893, %v897
      %v900 = vsel %vm354, %v895, %v891
      %v901 = vsel %vm354, %v897, %v893
      %v902 = vld [vmem:[%s359] ss:$8 sm:$0x3]
      %v904 = vlaneseq
      %v905 = vshrl.u32 %v904, 7
      %v906 = vsub.s32 0, %v905
      %v907 = vrot.slane %v902, %v906
      %v908 = vlaneseq
      %v909 = vshrl.u32 %v908, 7
      %v910 = vsub.s32 1, %v909
      %v911 = vrot.slane %v902, %v910
      %v914 = vmul.f32 %v900, %v907
      %v915 = vmul.f32 %v898, %v911
      %v916 = vmul.f32 %v901, %v907
      %v917 = vmul.f32 %v899, %v911
      %v918 = vpack.c.bf16 %v916, %v914
      %v919 = vpack.c.bf16 %v917, %v915
      %v922 = vunpack.c.l.b16 %v918
      %v923 = vunpack.c.l.b16 %v919
      %v924 = vunpack.c.h.b16 %v918
      %v925 = vunpack.c.h.b16 %v919
      %v926 = vpack.c.b16 %v923, %v922
      %v927 = vpack.c.b16 %v925, %v924
      %930 = vst [vmem:[#allocation2 + $0x20] sm:$0xff] %v926
      %931 = vst [vmem:[#allocation2 + $0x28] sm:$0xff] %v927
      %932 = vrot.lane.b32.xlu0 %v802, 1
      %v933 = vpop.permute.xlu0 %932
      %934 = vrot.lane.b32.xlu0 %v804, 1
      %v935 = vpop.permute.xlu0 %934
      %936 = vrot.lane.b32.xlu0 %v803, 1
      %v937 = vpop.permute.xlu0 %936
      %938 = vrot.lane.b32.xlu0 %v805, 1
      %v939 = vpop.permute.xlu0 %938
      %v940 = vsel %vm398, %v933, %v937
      %v941 = vsel %vm398, %v935, %v939
      %v942 = vsel %vm398, %v937, %v933
      %v943 = vsel %vm398, %v939, %v935
      %v944 = vld [vmem:[%s403] ss:$8 sm:$0x3]
      %v946 = vlaneseq
      %v947 = vshrl.u32 %v946, 7
      %v948 = vsub.s32 0, %v947
      %v949 = vrot.slane %v944, %v948
      %v950 = vlaneseq
      %v951 = vshrl.u32 %v950, 7
      %v952 = vsub.s32 1, %v951
      %v953 = vrot.slane %v944, %v952
      %v956 = vmul.f32 %v942, %v949
      %v957 = vmul.f32 %v940, %v953
      %v958 = vmul.f32 %v943, %v949
      %v959 = vmul.f32 %v941, %v953
      %v960 = vpack.c.bf16 %v958, %v956
      %v961 = vpack.c.bf16 %v959, %v957
      %v964 = vunpack.c.l.b16 %v960
      %v965 = vunpack.c.l.b16 %v961
      %v966 = vunpack.c.h.b16 %v960
      %v967 = vunpack.c.h.b16 %v961
      %v968 = vpack.c.b16 %v965, %v964
      %v969 = vpack.c.b16 %v967, %v966
      %972 = vst [vmem:[#allocation2 + $0x30] sm:$0xff] %v968
      %973 = vst [vmem:[#allocation2 + $0x38] sm:$0xff] %v969
      %v974 = vpack.c.bf16 %v804, %v802
      %v975 = vpack.c.bf16 %v805, %v803
      %v978 = vunpack.c.l.b16 %v974
      %v979 = vunpack.c.l.b16 %v975
      %v980 = vunpack.c.h.b16 %v974
      %v981 = vunpack.c.h.b16 %v975
      %v982 = vpack.c.b16 %v979, %v978
      %v983 = vpack.c.b16 %v981, %v980
      %986 = vst [vmem:[#allocation2 + $0x40] sm:$0xff] %v982
      %987 = vst [vmem:[#allocation2 + $0x48] sm:$0xff] %v983
      %988 = vrot.lane.b32.xlu0 %v802, 127
      %v989 = vpop.permute.xlu0 %988
      %990 = vrot.lane.b32.xlu0 %v804, 127
      %v991 = vpop.permute.xlu0 %990
      %992 = vrot.lane.b32.xlu0 %v803, 127
      %v993 = vpop.permute.xlu0 %992
      %994 = vrot.lane.b32.xlu0 %v805, 127
      %v995 = vpop.permute.xlu0 %994
      %v996 = vsel %vm456, %v989, %v993
      %v997 = vsel %vm456, %v991, %v995
      %v998 = vsel %vm456, %v993, %v989
      %v999 = vsel %vm456, %v995, %v991
      %v1000 = vld [vmem:[%s461] ss:$8 sm:$0x3]
      %v1002 = vlaneseq
      %v1003 = vshrl.u32 %v1002, 7
      %v1004 = vsub.s32 0, %v1003
      %v1005 = vrot.slane %v1000, %v1004
      %v1006 = vlaneseq
      %v1007 = vshrl.u32 %v1006, 7
      %v1008 = vsub.s32 1, %v1007
      %v1009 = vrot.slane %v1000, %v1008
      %v1012 = vmul.f32 %v996, %v1005
      %v1013 = vmul.f32 %v998, %v1009
      %v1014 = vmul.f32 %v997, %v1005
      %v1015 = vmul.f32 %v999, %v1009
      %v1016 = vpack.c.bf16 %v1014, %v1012
      %v1017 = vpack.c.bf16 %v1015, %v1013
      %v1020 = vunpack.c.l.b16 %v1016
      %v1021 = vunpack.c.l.b16 %v1017
      %v1022 = vunpack.c.h.b16 %v1016
      %v1023 = vunpack.c.h.b16 %v1017
      %v1024 = vpack.c.b16 %v1021, %v1020
      %v1025 = vpack.c.b16 %v1023, %v1022
      %1028 = vst [vmem:[#allocation2 + $0x50] sm:$0xff] %v1024
      %1029 = vst [vmem:[#allocation2 + $0x58] sm:$0xff] %v1025
      %1030 = vrot.lane.b32.xlu0 %v802, 113
      %v1031 = vpop.permute.xlu0 %1030
      %1032 = vrot.lane.b32.xlu0 %v804, 113
      %v1033 = vpop.permute.xlu0 %1032
      %1034 = vrot.lane.b32.xlu0 %v803, 113
      %v1035 = vpop.permute.xlu0 %1034
      %1036 = vrot.lane.b32.xlu0 %v805, 113
      %v1037 = vpop.permute.xlu0 %1036
      %v1038 = vsel %vm500, %v1031, %v1035
      %v1039 = vsel %vm500, %v1033, %v1037
      %v1040 = vsel %vm500, %v1035, %v1031
      %v1041 = vsel %vm500, %v1037, %v1033
      %v1042 = vld [vmem:[%s505] ss:$8 sm:$0x3]
      %v1044 = vlaneseq
      %v1045 = vshrl.u32 %v1044, 7
      %v1046 = vsub.s32 0, %v1045
      %v1047 = vrot.slane %v1042, %v1046
      %v1048 = vlaneseq
      %v1049 = vshrl.u32 %v1048, 7
      %v1050 = vsub.s32 1, %v1049
      %v1051 = vrot.slane %v1042, %v1050
      %v1054 = vmul.f32 %v1038, %v1047
      %v1055 = vmul.f32 %v1040, %v1051
      %v1056 = vmul.f32 %v1039, %v1047
      %v1057 = vmul.f32 %v1041, %v1051
      %v1058 = vpack.c.bf16 %v1056, %v1054
      %v1059 = vpack.c.bf16 %v1057, %v1055
      %v1062 = vunpack.c.l.b16 %v1058
      %v1063 = vunpack.c.l.b16 %v1059
      %v1064 = vunpack.c.h.b16 %v1058
      %v1065 = vunpack.c.h.b16 %v1059
      %v1066 = vpack.c.b16 %v1063, %v1062
      %v1067 = vpack.c.b16 %v1065, %v1064
      %1070 = vst [vmem:[#allocation2 + $0x60] sm:$0xff] %v1066
      %1071 = vst [vmem:[#allocation2 + $0x68] sm:$0xff] %v1067
      %1072 = vrot.lane.b32.xlu0 %v802, 112
      %v1073 = vpop.permute.xlu0 %1072
      %1074 = vrot.lane.b32.xlu0 %v804, 112
      %v1075 = vpop.permute.xlu0 %1074
      %1076 = vrot.lane.b32.xlu0 %v803, 112
      %v1077 = vpop.permute.xlu0 %1076
      %1078 = vrot.lane.b32.xlu0 %v805, 112
      %v1079 = vpop.permute.xlu0 %1078
      %v1080 = vsel %vm544, %v1073, %v1077
      %v1081 = vsel %vm544, %v1075, %v1079
      %v1082 = vsel %vm544, %v1077, %v1073
      %v1083 = vsel %vm544, %v1079, %v1075
      %v1084 = vld [vmem:[%s549] ss:$8 sm:$0x3]
      %v1086 = vlaneseq
      %v1087 = vshrl.u32 %v1086, 7
      %v1088 = vsub.s32 0, %v1087
      %v1089 = vrot.slane %v1084, %v1088
      %v1090 = vlaneseq
      %v1091 = vshrl.u32 %v1090, 7
      %v1092 = vsub.s32 1, %v1091
      %v1093 = vrot.slane %v1084, %v1092
      %v1096 = vmul.f32 %v1080, %v1089
      %v1097 = vmul.f32 %v1082, %v1093
      %v1098 = vmul.f32 %v1081, %v1089
      %v1099 = vmul.f32 %v1083, %v1093
      %v1100 = vpack.c.bf16 %v1098, %v1096
      %v1101 = vpack.c.bf16 %v1099, %v1097
      %v1104 = vunpack.c.l.b16 %v1100
      %v1105 = vunpack.c.l.b16 %v1101
      %v1106 = vunpack.c.h.b16 %v1100
      %v1107 = vunpack.c.h.b16 %v1101
      %v1108 = vpack.c.b16 %v1105, %v1104
      %v1109 = vpack.c.b16 %v1107, %v1106
      %1112 = vst [vmem:[#allocation2 + $0x70] sm:$0xff] %v1108
      %1113 = vst [vmem:[#allocation2 + $0x78] sm:$0xff] %v1109
      %1114 = vrot.lane.b32.xlu0 %v802, 111
      %v1115 = vpop.permute.xlu0 %1114
      %1116 = vrot.lane.b32.xlu0 %v804, 111
      %v1117 = vpop.permute.xlu0 %1116
      %1118 = vrot.lane.b32.xlu0 %v803, 111
      %v1119 = vpop.permute.xlu0 %1118
      %1120 = vrot.lane.b32.xlu0 %v805, 111
      %v1121 = vpop.permute.xlu0 %1120
      %v1122 = vsel %vm588, %v1115, %v1119
      %v1123 = vsel %vm588, %v1117, %v1121
      %v1124 = vsel %vm588, %v1119, %v1115
      %v1125 = vsel %vm588, %v1121, %v1117
      %v1126 = vld [vmem:[%s593] ss:$8 sm:$0x3]
      %v1128 = vlaneseq
      %v1129 = vshrl.u32 %v1128, 7
      %v1130 = vsub.s32 0, %v1129
      %v1131 = vrot.slane %v1126, %v1130
      %v1132 = vlaneseq
      %v1133 = vshrl.u32 %v1132, 7
      %v1134 = vsub.s32 1, %v1133
      %v1135 = vrot.slane %v1126, %v1134
      %v1138 = vmul.f32 %v1122, %v1131
      %v1139 = vmul.f32 %v1124, %v1135
      %v1140 = vmul.f32 %v1123, %v1131
      %v1141 = vmul.f32 %v1125, %v1135
      %v1142 = vpack.c.bf16 %v1140, %v1138
      %v1143 = vpack.c.bf16 %v1141, %v1139
      %v1146 = vunpack.c.l.b16 %v1142
      %v1147 = vunpack.c.l.b16 %v1143
      %v1148 = vunpack.c.h.b16 %v1142
      %v1149 = vunpack.c.h.b16 %v1143
      %v1150 = vpack.c.b16 %v1147, %v1146
      %v1151 = vpack.c.b16 %v1149, %v1148
      %1154 = vst [vmem:[#allocation2 + $0x80] sm:$0xff] %v1150
      %1155 = vst [vmem:[#allocation2 + $0x88] sm:$0xff] %v1151
      %v1156 = vld [vmem:[%s3] sm:$0xff]
      %v1157 = vld [vmem:[%s3 + $0x8] sm:$0xff]
      %v1158 = vld [vmem:[#allocation2] sm:$0xff]
      %v1159 = vld [vmem:[#allocation2 + $0x8] sm:$0xff]
      %v1160 = vld [vmem:[#allocation2 + $0x10] sm:$0xff]
      %v1161 = vld [vmem:[#allocation2 + $0x18] sm:$0xff]
      %v1162 = vld [vmem:[#allocation2 + $0x20] sm:$0xff]
      %v1163 = vld [vmem:[#allocation2 + $0x28] sm:$0xff]
      %v1164 = vld [vmem:[#allocation2 + $0x30] sm:$0xff]
      %v1165 = vld [vmem:[#allocation2 + $0x38] sm:$0xff]
      %v1166 = vld [vmem:[#allocation2 + $0x40] sm:$0xff]
      %v1167 = vld [vmem:[#allocation2 + $0x48] sm:$0xff]
      %v1168 = vld [vmem:[#allocation2 + $0x50] sm:$0xff]
      %v1169 = vld [vmem:[#allocation2 + $0x58] sm:$0xff]
      %v1170 = vld [vmem:[#allocation2 + $0x60] sm:$0xff]
      %v1171 = vld [vmem:[#allocation2 + $0x68] sm:$0xff]
      %v1172 = vld [vmem:[#allocation2 + $0x70] sm:$0xff]
      %v1173 = vld [vmem:[#allocation2 + $0x78] sm:$0xff]
      %v1174 = vld [vmem:[#allocation2 + $0x80] sm:$0xff]
      %v1175 = vld [vmem:[#allocation2 + $0x88] sm:$0xff]
      %v1176 = vld [vmem:[%s4] sm:$0xff]
      %v1177 = vld [vmem:[%s4 + $0x8] sm:$0xff]
      %1179 = vset.pattern.permute.xlu0 0
      %1180 = vperm.xlu0 %1179, %v1176
      %v1181 = vpop.permute.xlu0 %1180
      %1184 = vset.pattern.permute.xlu0 0
      %1185 = vperm.xlu0 %1184, %v1177
      %v1186 = vpop.permute.xlu0 %1185
      %v1190 = vunpack.c.l.b16 %v1156
      %v1191 = vunpack.c.h.b16 %v1156
      %v1192 = vunpack.c.l.b16 %v1157
      %v1193 = vunpack.c.h.b16 %v1157
      %v1194 = vpack.c.b16 %v1192, %v1190
      %v1195 = vpack.c.b16 %v1193, %v1191
      %v1215 = vunpack.c.l.b16 %v1158
      %v1216 = vunpack.c.h.b16 %v1158
      %v1217 = vunpack.c.l.b16 %v1159
      %v1218 = vunpack.c.h.b16 %v1159
      %v1219 = vunpack.c.l.b16 %v1160
      %v1220 = vunpack.c.h.b16 %v1160
      %v1221 = vunpack.c.l.b16 %v1161
      %v1222 = vunpack.c.h.b16 %v1161
      %v1223 = vunpack.c.l.b16 %v1162
      %v1224 = vunpack.c.h.b16 %v1162
      %v1225 = vunpack.c.l.b16 %v1163
      %v1226 = vunpack.c.h.b16 %v1163
      %v1227 = vunpack.c.l.b16 %v1164
      %v1228 = vunpack.c.h.b16 %v1164
      %v1229 = vunpack.c.l.b16 %v1165
      %v1230 = vunpack.c.h.b16 %v1165
      %v1231 = vunpack.c.l.b16 %v1166
      %v1232 = vunpack.c.h.b16 %v1166
      %v1233 = vunpack.c.l.b16 %v1167
      %v1234 = vunpack.c.h.b16 %v1167
      %v1235 = vunpack.c.l.b16 %v1168
      %v1236 = vunpack.c.h.b16 %v1168
      %v1237 = vunpack.c.l.b16 %v1169
      %v1238 = vunpack.c.h.b16 %v1169
      %v1239 = vunpack.c.l.b16 %v1170
      %v1240 = vunpack.c.h.b16 %v1170
      %v1241 = vunpack.c.l.b16 %v1171
      %v1242 = vunpack.c.h.b16 %v1171
      %v1243 = vunpack.c.l.b16 %v1172
      %v1244 = vunpack.c.h.b16 %v1172
      %v1245 = vunpack.c.l.b16 %v1173
      %v1246 = vunpack.c.h.b16 %v1173
      %v1247 = vunpack.c.l.b16 %v1174
      %v1248 = vunpack.c.h.b16 %v1174
      %v1249 = vunpack.c.l.b16 %v1175
      %v1250 = vunpack.c.h.b16 %v1175
      %v1251 = vpack.c.b16 %v1217, %v1215
      %v1252 = vpack.c.b16 %v1218, %v1216
      %v1253 = vpack.c.b16 %v1221, %v1219
      %v1254 = vpack.c.b16 %v1222, %v1220
      %v1255 = vpack.c.b16 %v1225, %v1223
      %v1256 = vpack.c.b16 %v1226, %v1224
      %v1257 = vpack.c.b16 %v1229, %v1227
      %v1258 = vpack.c.b16 %v1230, %v1228
      %v1259 = vpack.c.b16 %v1233, %v1231
      %v1260 = vpack.c.b16 %v1234, %v1232
      %v1261 = vpack.c.b16 %v1237, %v1235
      %v1262 = vpack.c.b16 %v1238, %v1236
      %v1263 = vpack.c.b16 %v1241, %v1239
      %v1264 = vpack.c.b16 %v1242, %v1240
      %v1265 = vpack.c.b16 %v1245, %v1243
      %v1266 = vpack.c.b16 %v1246, %v1244
      %v1267 = vpack.c.b16 %v1249, %v1247
      %v1268 = vpack.c.b16 %v1250, %v1248
      %v1288 = vsel %vm755, %v1195, 0
      %1290 = vmatprep.subr.bf16.mxu0 %v1266
      %1291 = vmatpush1.bf16.msra.mxu0 %v1265
      %1292 = vmatprep.subr.bf16.mxu0 %v1264
      %1293 = vmatpush1.bf16.msra.mxu0 %v1263
      %1294 = vmatprep.subr.bf16.mxu0 %v1262
      %1295 = vmatpush1.bf16.msra.mxu0 %v1261
      %1296 = vmatprep.subr.bf16.mxu0 %v1260
      %1297 = vmatpush1.bf16.msra.mxu0 %v1259
      %1298 = vmatprep.subr.bf16.mxu0 %v1258
      %1299 = vmatpush1.bf16.msra.mxu0 %v1257
      %1300 = vmatprep.subr.bf16.mxu0 %v1256
      %1301 = vmatpush1.bf16.msra.mxu0 %v1255
      %1302 = vmatprep.subr.bf16.mxu0 %v1254
      %1303 = vmatpush1.bf16.msra.mxu0 %v1253
      %1304 = vmatprep.subr.bf16.mxu0 %v1252
      %1305 = vmatpush1.bf16.msra.mxu0 %v1251
      %1306 = vmatprep.subr.bf16.mxu0 0
      %1307 = vmatpush2.bf16.msra.mxu0 0
      %1308 = vmatprep.subr.bf16.mxu0 0
      %1309 = vmatpush2.bf16.msra.mxu0 0
      %1310 = vmatprep.subr.bf16.mxu0 0
      %1311 = vmatpush2.bf16.msra.mxu0 0
      %1312 = vmatprep.subr.bf16.mxu0 0
      %1313 = vmatpush2.bf16.msra.mxu0 0
      %1314 = vmatprep.subr.bf16.mxu0 0
      %1315 = vmatpush2.bf16.msra.mxu0 0
      %1316 = vmatprep.subr.bf16.mxu0 0
      %1317 = vmatpush2.bf16.msra.mxu0 0
      %1318 = vmatprep.subr.bf16.mxu0 0
      %1319 = vmatpush2.bf16.msra.mxu0 0
      %1320 = vmatprep.subr.bf16.mxu0 %v1268
      %1321 = vmatpush2.bf16.msra.mxu0 %v1267
      %1322 = vmatprep.mubr.bf16.mxu0 %v1288
      %1323 = vmatmul.mubr.bf16.gmra.mxu0 %v1194
      %v1324 = vpop.f32.mrf.mxu0
      %v1325 = vadd.f32 %v1181, %v1324
      %v1326 = vpop.f32.mrf.mxu0
      %v1327 = vadd.f32 %v1181, %v1326
      %v1328 = vpop.f32.mrf.mxu0
      %v1329 = vadd.f32 %v1186, %v1328
      %v1330 = vpop.f32.mrf.mxu0
      %v1331 = vadd.f32 %v1186, %v1330
      %1332 = vdwg.mxu0
      %v1333 = vadd.f32 %v1325, %v802
      %v1334 = vadd.f32 %v1327, %v803
      %v1335 = vadd.f32 %v1329, %v804
      %v1336 = vadd.f32 %v1331, %v805
      %v1337 = vmax.f32 %v1333, 0.0
      %v1338 = vmax.f32 %v1334, 0.0
      %v1339 = vmax.f32 %v1335, 0.0
      %v1340 = vmax.f32 %v1336, 0.0
      %1341 = vst [vmem:[%s251] sm:$0xff] %v1337
      %1342 = vst [vmem:[%s251 + $0x8] sm:$0xff] %v1338
      %1343 = vst [vmem:[%s251 + $0x10] sm:$0xff] %v1339
      %1344 = vst [vmem:[%s251 + $0x18] sm:$0xff] %v1340
      %p1345 = scmp.lt.s32.totalorder %s17, 1
      %s1346 = scalar_select %p1345, %s17, 1
      %s1347 = smul.addr %s1346, 4
      %s1348 = smul.addr %s1347, 8
      %s1349 = scalar_lea.vmem %s6, %s1348
      // Predicated region
      $region45: #{resblock_forward.1} parent=43 // pred_check
        %p1350 = pneg %p166
      $region46: #{resblock_forward.1} parent=43 // pred_check_branch
        %1352 = sbr.rel (%p1350) target = $region48
      $region47: #{resblock_forward.1} parent=43 // pred_region
        _
      $region48: #{resblock_forward.1} parent=43 // pred_fallthru
        _
    $region44: #{resblock_forward.1} parent=5 // pred_fallthru
      _
    %p1353 = scmp.le.s32.totalorder 2, %s12
    // Predicated region
    $region49: #{resblock_forward.1} parent=5 // pred_check
      %p1354 = pneg %p1353
    $region50: #{resblock_forward.1} parent=5 // pred_check_branch
      %1356 = sbr.rel (%p1354) target = $region52
    $region51: #{resblock_forward.1} parent=5 // pred_region
      %s1357 = ssub.s32 %s12, 2
      // Predicated region
      $region53: #{resblock_forward.1} parent=51 // pred_check
        %p1358 = pneg %p172
      $region54: #{resblock_forward.1} parent=51 // pred_check_branch
        %1360 = sbr.rel (%p1358) target = $region56
      $region55: #{resblock_forward.1} parent=51 // pred_region
        %p1361 = scmp.lt.s32.totalorder %s18, 1
        %s1362 = scalar_select %p1361, %s18, 1
        %s1363 = smul.addr %s1362, 4
        %s1364 = smul.addr %s1363, 8
        %s1365 = scalar_lea.vmem %s6, %s1364
      $region56: #{resblock_forward.1} parent=51 // pred_fallthru
        _
    $region52: #{resblock_forward.1} parent=5 // pred_fallthru
      _
  $region6: #{resblock_forward.1} parent=0 // loop_footer
    %s16 = sadd.s32 1, %s12
  $region7: #{resblock_forward.1} parent=0 // loop_footer_branch
    %11 = sbr.rel target = $region3
  $region8: #{resblock_forward.1} parent=0 // loop_exit
    _

</llo_original>
